<compile_context>
chip_gen: v7x
topology: tpu7x:2x2x1
jax: 0.10.0
libtpu: 0.0.40
codegen_flags: <defaults>
</compile_context>

<pallas_src>
import functools
import math

import jax
import jax.numpy as jnp
from jax import lax
from jax.experimental import pallas as pl
from jax.experimental.pallas import tpu as pltpu


# ----------------------------------------------------------------------------
# helpers
# ----------------------------------------------------------------------------
def _ln_f32(x, g, b, eps=1e-5):
    """Row-wise LayerNorm in f32 (PyTorch nn.LayerNorm default eps)."""
    mean = jnp.mean(x, axis=-1, keepdims=True)
    xc = x - mean
    var = jnp.mean(xc * xc, axis=-1, keepdims=True)
    return xc * lax.rsqrt(var + eps) * g + b


def _wspec():
    """Weight/bias spec: whole array resident in VMEM once (single-buffered)."""
    return pl.BlockSpec(memory_space=pltpu.MemorySpace.VMEM)


@functools.lru_cache(maxsize=None)
def _vmem_limit_bytes():
    """Generation-aware scoped-VMEM limit (~80% of capacity, capped at 100 MiB)."""
    cap = 64 * 1024 * 1024  # conservative fallback (v7x physical VMEM per TC)
    try:
        cap = int(pltpu.get_tpu_info().vmem_capacity_bytes)
    except Exception:
        pass
    return int(min(cap * 0.8, 100 * 1024 * 1024))


# ----------------------------------------------------------------------------
# fused pre-stage kernel: patchify matmul + CLS + pos-emb + ln_pre
# ----------------------------------------------------------------------------
def _make_pre_kernel():
    def kernel(p_ref, wconv_ref, cls_ref, pos_ref, g_ref, b_ref, o_ref):
        # patch embedding (conv1 as im2col matmul) -> f32 accumulator, (Np, D)
        feat = jnp.dot(p_ref[0], wconv_ref[...],
                       preferred_element_type=jnp.float32)
        # full (L, D) token slab built in registers; single store (no masked
        # 1-row store + unaligned (1..L) store).
        rows = jnp.concatenate([cls_ref[...], feat], axis=0) + pos_ref[...]
        o_ref[0] = _ln_f32(rows, g_ref[...], b_ref[...]).astype(o_ref.dtype)

    return kernel


def pre_forward(params, x):
    """x: (B, 3, H, W) NCHW -> (B, L, D) float32 residual stream (BLD layout)."""
    compute_dtype = params["compute_dtype"]
    B, C, H, W = x.shape
    P = params["patch_size"]
    D = params["width"]
    Hp, Wp = H // P, W // P
    Np = Hp * Wp
    L = Np + 1
    CPP = C * P * P
    K_pad = params["conv1_w_mat"].shape[0]        # lane-aligned im2col K dim

    # im2col (pure layout glue; stride == kernel_size, no bias in conv1)
    patches = (x.reshape(B, C, Hp, P, Wp, P)
                .transpose(0, 2, 4, 1, 3, 5)      # (B, Hp, Wp, C, P, P)
                .reshape(B, Np, CPP))
    if K_pad != CPP:
        patches = jnp.pad(patches, ((0, 0), (0, 0), (0, K_pad - CPP)))
    patches = patches.astype(compute_dtype)

    return pl.pallas_call(
        _make_pre_kernel(),
        grid=(B,),
        in_specs=[pl.BlockSpec((1, Np, K_pad), lambda b: (b, 0, 0)),
                  _wspec(), _wspec(), _wspec(), _wspec(), _wspec()],
        out_specs=pl.BlockSpec((1, L, D), lambda b: (b, 0, 0)),
        out_shape=jax.ShapeDtypeStruct((B, L, D), jnp.float32),
        compiler_params=pltpu.CompilerParams(
            dimension_semantics=("parallel",),
            vmem_limit_bytes=_vmem_limit_bytes(),
        ),
    )(patches, params["conv1_w_mat"], params["class_embedding"],
      params["positional_embedding"], params["ln_pre_g"], params["ln_pre_b"])


# ----------------------------------------------------------------------------
# fused residual attention block kernel (one pallas_call per layer)
# ----------------------------------------------------------------------------
def _make_block_kernel(heads, compute_dtype):
    def kernel(x_ref, ln1_g_ref, ln1_b_ref, wqkv_ref, bqkv_ref, wo_ref, bo_ref,
               ln2_g_ref, ln2_b_ref, wfc_ref, bfc_ref, wproj_ref, bproj_ref,
               o_ref):
        x = x_ref[0]                              # (L, D) f32 residual stream
        L, D = x.shape
        Dh = D // heads

        # ---- attention branch: x + attn(ln_1(x)) ----
        h = _ln_f32(x, ln1_g_ref[...], ln1_b_ref[...])
        # 1/sqrt(Dh) softmax scale is pre-folded into the Q columns of
        # wqkv/bqkv at init, so no in-kernel scale multiply is needed.
        qkv = jnp.dot(h.astype(compute_dtype), wqkv_ref[...],
                      preferred_element_type=jnp.float32) + bqkv_ref[...]   # (L, 3D)
        q = qkv[:, 0:D]
        k = qkv[:, D:2 * D]
        v = qkv[:, 2 * D:3 * D]

        # TODO(synk): for production heads=16 / L=257, replace this unrolled
        # per-head loop with a batched (heads, L, Dh) formulation + flash-style
        # 128-wide key tiles (lane-exact scores, lower vreg/VMEM pressure).
        ctx_heads = []
        for hh in range(heads):                   # heads is static -> unrolled
            sl = slice(hh * Dh, (hh + 1) * Dh)
            qh = q[:, sl].astype(compute_dtype)
            kh = k[:, sl].astype(compute_dtype)
            vh = v[:, sl].astype(compute_dtype)
            s = jnp.einsum("ld,md->lm", qh, kh,
                           preferred_element_type=jnp.float32)              # (L, L)
            m = jnp.max(s, axis=-1, keepdims=True)
            p = jnp.exp(s - m)
            # approx reciprocal = EUP slot (free); switch approx=False for
            # strict parity against a PyTorch fp32 reference.
            p = p * pl.reciprocal(jnp.sum(p, axis=-1, keepdims=True), approx=True)
            ctx_heads.append(jnp.einsum("lm,md->ld", p.astype(compute_dtype), vh,
                                        preferred_element_type=jnp.float32))
        ctx = jnp.concatenate(ctx_heads, axis=-1)                           # (L, D)
        # single merged out-projection: one K=D matmul (full MXU depth)
        y = x + bo_ref[...] + jnp.dot(ctx.astype(compute_dtype), wo_ref[...],
                                      preferred_element_type=jnp.float32)

        # ---- MLP branch: y + mlp(ln_2(y)) ----
        # TODO(synk): tile over Dff with an f32 VMEM accumulator for CLIP-L on
        # v7x (64 MiB VMEM); whole-width blocks are fine at these shapes.
        h2 = _ln_f32(y, ln2_g_ref[...], ln2_b_ref[...])
        f = jnp.dot(h2.astype(compute_dtype), wfc_ref[...],
                    preferred_element_type=jnp.float32) + bfc_ref[...]
        f = f * jax.nn.sigmoid(1.702 * f)         # QuickGELU in f32
        out = y + jnp.dot(f.astype(compute_dtype), wproj_ref[...],
                          preferred_element_type=jnp.float32) + bproj_ref[...]

        o_ref[0] = out.astype(o_ref.dtype)

    return kernel


def residual_block(x_bld, blk, heads, compute_dtype):
    """One fused CLIP ResidualAttentionBlock.  x_bld: (B, L, D) f32 -> same."""
    B, L, D = x_bld.shape

    # TODO(synk): add a second "parallel" grid axis over L row-tiles so a B=1
    # (or odd-B) workload still uses both TensorCores on v7x; and prefetch the
    # next layer's weights cross-call (P10) to hide weight DMA on v5e.
    in_specs = [pl.BlockSpec((1, L, D), lambda b: (b, 0, 0))] + [_wspec()] * 12

    return pl.pallas_call(
        _make_block_kernel(heads, compute_dtype),
        grid=(B,),
        in_specs=in_specs,
        out_specs=pl.BlockSpec((1, L, D), lambda b: (b, 0, 0)),
        out_shape=jax.ShapeDtypeStruct((B, L, D), x_bld.dtype),
        input_output_aliases={0: 0},              # update residual stream in place
        compiler_params=pltpu.CompilerParams(
            dimension_semantics=("parallel",),
            vmem_limit_bytes=_vmem_limit_bytes(),
        ),
    )(x_bld, blk["ln1_g"], blk["ln1_b"], blk["wqkv"], blk["bqkv"],
      blk["wo"], blk["bo"], blk["ln2_g"], blk["ln2_b"],
      blk["wfc"], blk["bfc"], blk["wproj"], blk["bproj"])


def transformer_forward(params, x_bld, start_layer=None, end_layer=None):
    """Mirrors TransformerWrapper.forward, but on a BLD-layout activation slab."""
    blocks = params["blocks"]
    if start_layer is None:
        start_layer = 0
    if end_layer is None:
        end_layer = len(blocks) - 1
    if end_layer < start_layer:
        return x_bld
    for blk in blocks[start_layer:end_layer + 1]:
        x_bld = residual_block(x_bld, blk, params["heads"], params["compute_dtype"])
    return x_bld


# ----------------------------------------------------------------------------
# fused post-stage kernel: ln_post(cls) @ proj
# ----------------------------------------------------------------------------
def _make_post_kernel(compute_dtype):
    def kernel(cls_ref, g_ref, b_ref, proj_ref, o_ref):
        h = _ln_f32(cls_ref[...], g_ref[...], b_ref[...])
        o_ref[...] = jnp.dot(h.astype(compute_dtype), proj_ref[...],
                             preferred_element_type=jnp.float32).astype(o_ref.dtype)

    return kernel


def post_forward(params, x_bld):
    compute_dtype = params["compute_dtype"]
    cls = x_bld[:, 0, :]                          # CLS token, (B, D) f32
    B, D = cls.shape
    out_dim = params["proj"].shape[1]
    return pl.pallas_call(
        _make_post_kernel(compute_dtype),
        out_shape=jax.ShapeDtypeStruct((B, out_dim), jnp.float32),
    )(cls, params["ln_post_g"], params["ln_post_b"], params["proj"])


# ----------------------------------------------------------------------------
# full forward (mirrors ImageEncoderWrapper.forward semantics)
# ----------------------------------------------------------------------------
def image_encoder_forward(params, x, start_layer=None, end_layer=None):
    if start_layer is None:
        x = pre_forward(params, x)                # (B, L, D) f32, BLD end-to-end
    else:
        x = x.transpose(1, 0, 2)                  # caller supplies LND (PyTorch layout)
    x = transformer_forward(params, x, start_layer, end_layer)
    if end_layer is not None:
        return x.transpose(1, 0, 2)               # expose LND like the PyTorch module
    return post_forward(params, x)


# ----------------------------------------------------------------------------
# deterministic synthetic parameters (weights pre-cast to the MXU dtype once)
# ----------------------------------------------------------------------------
def init_params(key, *, input_resolution, patch_size, width, layers, heads,
                output_dim, compute_dtype=jnp.bfloat16):
    keys = iter(jax.random.split(key, 8 + 8 * layers))
    scale = 0.02
    n_patches = (input_resolution // patch_size) ** 2
    L = n_patches + 1
    CPP = 3 * patch_size * patch_size
    K_pad = ((CPP + 127) // 128) * 128            # lane-aligned im2col K dim
    attn_scale = 1.0 / math.sqrt(width // heads)

    def rnd(shape, dtype):
        return (scale * jax.random.normal(next(keys), shape)).astype(dtype)

    # conv1 (stride == kernel, no bias) lowered to a zero-padded im2col matmul weight.
    conv_w = rnd((width, 3, patch_size, patch_size), jnp.float32)
    conv_mat = jnp.pad(conv_w.reshape(width, CPP).T, ((0, K_pad - CPP), (0, 0)))

    params = {
        "patch_size": patch_size,
        "width": width,
        "heads": heads,
        "output_dim": output_dim,
        "compute_dtype": compute_dtype,
        "conv1_w_mat": conv_mat.astype(compute_dtype),
        "class_embedding": rnd((1, width), jnp.float32),
        "positional_embedding": rnd((L, width), jnp.float32),
        "ln_pre_g": jnp.ones((1, width), jnp.float32),
        "ln_pre_b": jnp.zeros((1, width), jnp.float32),
        "ln_post_g": jnp.ones((1, width), jnp.float32),
        "ln_post_b": jnp.zeros((1, width), jnp.float32),
        "proj": rnd((width, output_dim), compute_dtype),
        "blocks": [],
    }
    for _ in range(layers):
        # NOTE (porting hazard): PyTorch nn.Linear / in_proj_weight are (out, in);
        # real CLIP weights must be transposed to the (in, out) layout used here,
        # and the same Q-column scaling applied to in_proj_weight / in_proj_bias.
        wqkv = scale * jax.random.normal(next(keys), (width, 3 * width))
        bqkv = jnp.zeros((1, 3 * width), jnp.float32)
        # Fold the 1/sqrt(Dh) softmax scale into the Q columns (weight AND bias):
        # removes one (L, D) VPU multiply per layer from the kernel.
        wqkv = wqkv.at[:, :width].multiply(attn_scale)
        bqkv = bqkv.at[:, :width].multiply(attn_scale)
        params["blocks"].append({
            "ln1_g": jnp.ones((1, width), jnp.float32),
            "ln1_b": jnp.zeros((1, width), jnp.float32),
            "wqkv": wqkv.astype(compute_dtype),
            "bqkv": bqkv,
            "wo": rnd((width, width), compute_dtype),
            "bo": jnp.zeros((1, width), jnp.float32),
            "ln2_g": jnp.ones((1, width), jnp.float32),
            "ln2_b": jnp.zeros((1, width), jnp.float32),
            "wfc": rnd((width, 4 * width), compute_dtype),
            "bfc": jnp.zeros((1, 4 * width), jnp.float32),
            "wproj": rnd((4 * width, width), compute_dtype),
            "bproj": jnp.zeros((1, width), jnp.float32),
        })
    return params


# ----------------------------------------------------------------------------
if __name__ == "__main__":
    key = jax.random.PRNGKey(0)
    kp, kx = jax.random.split(key)

    B = 2
    INPUT_RES = 16
    PATCH = 8           # -> 2x2 = 4 patches + 1 CLS = 5 tokens
    WIDTH = 32
    LAYERS = 2
    HEADS = 4
    OUT_DIM = 16

    params = init_params(
        kp,
        input_resolution=INPUT_RES,
        patch_size=PATCH,
        width=WIDTH,
        layers=LAYERS,
        heads=HEADS,
        output_dim=OUT_DIM,
        compute_dtype=jnp.bfloat16,
    )

    # NCHW image input, matching the PyTorch Conv2d convention.
    x = jax.random.normal(kx, (B, 3, INPUT_RES, INPUT_RES), dtype=jnp.float32)

    fwd = jax.jit(lambda img: image_encoder_forward(params, img))
    out = jax.block_until_ready(fwd(x))   # full path: pre -> transformer -> post

    assert out.shape == (B, OUT_DIM), out.shape
    assert bool(jnp.all(jnp.isfinite(out)))
    print("KERNEL_OK")
</pallas_src>

<mosaic_0001>
module attributes {stable_mosaic.version = 11 : i64} {
  func.func @kernel(%arg0: i32, %arg1: memref<1x4x256xbf16, #tpu.memory_space<vmem>>, %arg2: memref<256x32xbf16, #tpu.memory_space<vmem>>, %arg3: memref<1x32xf32, #tpu.memory_space<vmem>>, %arg4: memref<5x32xf32, #tpu.memory_space<vmem>>, %arg5: memref<1x32xf32, #tpu.memory_space<vmem>>, %arg6: memref<1x32xf32, #tpu.memory_space<vmem>>, %arg7: memref<1x5x32xf32, #tpu.memory_space<vmem>>) attributes {dimension_semantics = [#tpu.dimension_semantics<parallel>], iteration_bounds = array<i64: 2>, scalar_prefetch = 0 : i64, scratch_operands = 0 : i64, tpu.core_type = #tpu.core_type<tc>, window_params = [{transform_indices = @transform_0, window_bounds = array<i64: 1, 4, 256>}, {pipeline_mode = #tpu.pipeline_mode<synchronous>, transform_indices = @transform_1, window_bounds = array<i64: 256, 32>}, {pipeline_mode = #tpu.pipeline_mode<synchronous>, transform_indices = @transform_2, window_bounds = array<i64: 1, 32>}, {pipeline_mode = #tpu.pipeline_mode<synchronous>, transform_indices = @transform_3, window_bounds = array<i64: 5, 32>}, {pipeline_mode = #tpu.pipeline_mode<synchronous>, transform_indices = @transform_4, window_bounds = array<i64: 1, 32>}, {pipeline_mode = #tpu.pipeline_mode<synchronous>, transform_indices = @transform_5, window_bounds = array<i64: 1, 32>}, {transform_indices = @transform_6, window_bounds = array<i64: 1, 5, 32>}]} {
    %c0 = arith.constant 0 : index
    %c0_0 = arith.constant 0 : index
    %c0_1 = arith.constant 0 : index
    %0 = vector.load %arg1[%c0, %c0_0, %c0_1] : memref<1x4x256xbf16, #tpu.memory_space<vmem>>, vector<1x4x256xbf16>
    %1 = vector.shape_cast %0 : vector<1x4x256xbf16> to vector<4x256xbf16>
    %c0_2 = arith.constant 0 : index
    %c0_3 = arith.constant 0 : index
    %2 = vector.load %arg2[%c0_2, %c0_3] : memref<256x32xbf16, #tpu.memory_space<vmem>>, vector<256x32xbf16>
    %cst = arith.constant dense<0.000000e+00> : vector<4x32xf32>
    %3 = tpu.matmul %1, %2, %cst {dimension_numbers = #tpu.dot_dimension_numbers<[1], [0], [0], [1], [0, 0, 1, 1], [], []>} : vector<4x256xbf16>, vector<256x32xbf16>, vector<4x32xf32> -> vector<4x32xf32>
    %c0_4 = arith.constant 0 : index
    %c0_5 = arith.constant 0 : index
    %4 = vector.load %arg3[%c0_4, %c0_5] : memref<1x32xf32, #tpu.memory_space<vmem>>, vector<1x32xf32>
    %5 = tpu.concatenate %4, %3 in 0 : vector<1x32xf32>, vector<4x32xf32> -> vector<5x32xf32>
    %c0_6 = arith.constant 0 : index
    %c0_7 = arith.constant 0 : index
    %6 = vector.load %arg4[%c0_6, %c0_7] : memref<5x32xf32, #tpu.memory_space<vmem>>, vector<5x32xf32>
    %7 = arith.addf %5, %6 : vector<5x32xf32>
    %c0_8 = arith.constant 0 : index
    %c0_9 = arith.constant 0 : index
    %8 = vector.load %arg5[%c0_8, %c0_9] : memref<1x32xf32, #tpu.memory_space<vmem>>, vector<1x32xf32>
    %c0_10 = arith.constant 0 : index
    %c0_11 = arith.constant 0 : index
    %9 = vector.load %arg6[%c0_10, %c0_11] : memref<1x32xf32, #tpu.memory_space<vmem>>, vector<1x32xf32>
    %cst_12 = arith.constant dense<0.000000e+00> : vector<5xf32>
    %10 = vector.multi_reduction <add>, %7, %cst_12 [1] : vector<5x32xf32> to vector<5xf32>
    %11 = vector.shape_cast %10 : vector<5xf32> to vector<5x1xf32>
    %cst_13 = arith.constant 3.200000e+01 : f32
    %12 = vector.broadcast %cst_13 : f32 to vector<5x1xf32>
    %13 = arith.divf %11, %12 : vector<5x1xf32>
    %14 = vector.broadcast %13 : vector<5x1xf32> to vector<5x32xf32>
    %15 = arith.subf %7, %14 : vector<5x32xf32>
    %16 = arith.mulf %15, %15 : vector<5x32xf32>
    %cst_14 = arith.constant dense<0.000000e+00> : vector<5xf32>
    %17 = vector.multi_reduction <add>, %16, %cst_14 [1] : vector<5x32xf32> to vector<5xf32>
    %18 = vector.shape_cast %17 : vector<5xf32> to vector<5x1xf32>
    %cst_15 = arith.constant 3.200000e+01 : f32
    %19 = vector.broadcast %cst_15 : f32 to vector<5x1xf32>
    %20 = arith.divf %18, %19 : vector<5x1xf32>
    %cst_16 = arith.constant 9.99999974E-6 : f32
    %21 = vector.broadcast %cst_16 : f32 to vector<5x1xf32>
    %22 = arith.addf %20, %21 : vector<5x1xf32>
    %23 = math.rsqrt %22 : vector<5x1xf32>
    %24 = vector.broadcast %23 : vector<5x1xf32> to vector<5x32xf32>
    %25 = arith.mulf %15, %24 : vector<5x32xf32>
    %26 = vector.broadcast %8 : vector<1x32xf32> to vector<5x32xf32>
    %27 = arith.mulf %25, %26 : vector<5x32xf32>
    %28 = vector.broadcast %9 : vector<1x32xf32> to vector<5x32xf32>
    %29 = arith.addf %27, %28 : vector<5x32xf32>
    %c0_17 = arith.constant 0 : index
    %c0_18 = arith.constant 0 : index
    %c0_19 = arith.constant 0 : index
    %30 = vector.load %arg7[%c0_17, %c0_18, %c0_19] : memref<1x5x32xf32, #tpu.memory_space<vmem>>, vector<1x5x32xf32>
    %31 = vector.shape_cast %30 : vector<1x5x32xf32> to vector<5x32xf32>
    %32 = vector.shape_cast %29 : vector<5x32xf32> to vector<1x5x32xf32>
    tpu.vector_store %arg7[%c0_17, %c0_18, %c0_19], %32 {strides = array<i32>} : memref<1x5x32xf32, #tpu.memory_space<vmem>>, vector<1x5x32xf32>,
    return
  }
  func.func @transform_0(%arg0: i32) -> (i32, i32, i32) {
    %c0_i32 = arith.constant 0 : i32
    %c0_i32_0 = arith.constant 0 : i32
    %c0_i32_1 = arith.constant 0 : i32
    return %arg0, %c0_i32, %c0_i32_0 : i32, i32, i32
  }
  func.func @transform_1(%arg0: i32) -> (i32, i32) {
    %c0_i32 = arith.constant 0 : i32
    %c0_i32_0 = arith.constant 0 : i32
    %c0_i32_1 = arith.constant 0 : i32
    return %c0_i32, %c0_i32_0 : i32, i32
  }
  func.func @transform_2(%arg0: i32) -> (i32, i32) {
    %c0_i32 = arith.constant 0 : i32
    %c0_i32_0 = arith.constant 0 : i32
    %c0_i32_1 = arith.constant 0 : i32
    return %c0_i32, %c0_i32_0 : i32, i32
  }
  func.func @transform_3(%arg0: i32) -> (i32, i32) {
    %c0_i32 = arith.constant 0 : i32
    %c0_i32_0 = arith.constant 0 : i32
    %c0_i32_1 = arith.constant 0 : i32
    return %c0_i32, %c0_i32_0 : i32, i32
  }
  func.func @transform_4(%arg0: i32) -> (i32, i32) {
    %c0_i32 = arith.constant 0 : i32
    %c0_i32_0 = arith.constant 0 : i32
    %c0_i32_1 = arith.constant 0 : i32
    return %c0_i32, %c0_i32_0 : i32, i32
  }
  func.func @transform_5(%arg0: i32) -> (i32, i32) {
    %c0_i32 = arith.constant 0 : i32
    %c0_i32_0 = arith.constant 0 : i32
    %c0_i32_1 = arith.constant 0 : i32
    return %c0_i32, %c0_i32_0 : i32, i32
  }
  func.func @transform_6(%arg0: i32) -> (i32, i32, i32) {
    %c0_i32 = arith.constant 0 : i32
    %c0_i32_0 = arith.constant 0 : i32
    %c0_i32_1 = arith.constant 0 : i32
    return %arg0, %c0_i32, %c0_i32_0 : i32, i32, i32
  }
}

module attributes {stable_mosaic.version = 11 : i64} {
  func.func @kernel(%arg0: i32, %arg1: memref<1x5x32xf32, #tpu.memory_space<vmem>>, %arg2: memref<1x32xf32, #tpu.memory_space<vmem>>, %arg3: memref<1x32xf32, #tpu.memory_space<vmem>>, %arg4: memref<32x96xbf16, #tpu.memory_space<vmem>>, %arg5: memref<1x96xf32, #tpu.memory_space<vmem>>, %arg6: memref<32x32xbf16, #tpu.memory_space<vmem>>, %arg7: memref<1x32xf32, #tpu.memory_space<vmem>>, %arg8: memref<1x32xf32, #tpu.memory_space<vmem>>, %arg9: memref<1x32xf32, #tpu.memory_space<vmem>>, %arg10: memref<32x128xbf16, #tpu.memory_space<vmem>>, %arg11: memref<1x128xf32, #tpu.memory_space<vmem>>, %arg12: memref<128x32xbf16, #tpu.memory_space<vmem>>, %arg13: memref<1x32xf32, #tpu.memory_space<vmem>>, %arg14: memref<1x5x32xf32, #tpu.memory_space<vmem>>) attributes {dimension_semantics = [#tpu.dimension_semantics<parallel>], iteration_bounds = array<i64: 2>, scalar_prefetch = 0 : i64, scratch_operands = 0 : i64, tpu.core_type = #tpu.core_type<tc>, window_params = [{transform_indices = @transform_0, window_bounds = array<i64: 1, 5, 32>}, {pipeline_mode = #tpu.pipeline_mode<synchronous>, transform_indices = @transform_1, window_bounds = array<i64: 1, 32>}, {pipeline_mode = #tpu.pipeline_mode<synchronous>, transform_indices = @transform_2, window_bounds = array<i64: 1, 32>}, {pipeline_mode = #tpu.pipeline_mode<synchronous>, transform_indices = @transform_3, window_bounds = array<i64: 32, 96>}, {pipeline_mode = #tpu.pipeline_mode<synchronous>, transform_indices = @transform_4, window_bounds = array<i64: 1, 96>}, {pipeline_mode = #tpu.pipeline_mode<synchronous>, transform_indices = @transform_5, window_bounds = array<i64: 32, 32>}, {pipeline_mode = #tpu.pipeline_mode<synchronous>, transform_indices = @transform_6, window_bounds = array<i64: 1, 32>}, {pipeline_mode = #tpu.pipeline_mode<synchronous>, transform_indices = @transform_7, window_bounds = array<i64: 1, 32>}, {pipeline_mode = #tpu.pipeline_mode<synchronous>, transform_indices = @transform_8, window_bounds = array<i64: 1, 32>}, {pipeline_mode = #tpu.pipeline_mode<synchronous>, transform_indices = @transform_9, window_bounds = array<i64: 32, 128>}, {pipeline_mode = #tpu.pipeline_mode<synchronous>, transform_indices = @transform_10, window_bounds = array<i64: 1, 128>}, {pipeline_mode = #tpu.pipeline_mode<synchronous>, transform_indices = @transform_11, window_bounds = array<i64: 128, 32>}, {pipeline_mode = #tpu.pipeline_mode<synchronous>, transform_indices = @transform_12, window_bounds = array<i64: 1, 32>}, {transform_indices = @transform_13, window_bounds = array<i64: 1, 5, 32>}]} {
    %c0 = arith.constant 0 : index
    %c0_0 = arith.constant 0 : index
    %c0_1 = arith.constant 0 : index
    %0 = vector.load %arg1[%c0, %c0_0, %c0_1] : memref<1x5x32xf32, #tpu.memory_space<vmem>>, vector<1x5x32xf32>
    %1 = vector.shape_cast %0 : vector<1x5x32xf32> to vector<5x32xf32>
    %c0_2 = arith.constant 0 : index
    %c0_3 = arith.constant 0 : index
    %2 = vector.load %arg2[%c0_2, %c0_3] : memref<1x32xf32, #tpu.memory_space<vmem>>, vector<1x32xf32>
    %c0_4 = arith.constant 0 : index
    %c0_5 = arith.constant 0 : index
    %3 = vector.load %arg3[%c0_4, %c0_5] : memref<1x32xf32, #tpu.memory_space<vmem>>, vector<1x32xf32>
    %cst = arith.constant dense<0.000000e+00> : vector<5xf32>
    %4 = vector.multi_reduction <add>, %1, %cst [1] : vector<5x32xf32> to vector<5xf32>
    %5 = vector.shape_cast %4 : vector<5xf32> to vector<5x1xf32>
    %cst_6 = arith.constant 3.200000e+01 : f32
    %6 = vector.broadcast %cst_6 : f32 to vector<5x1xf32>
    %7 = arith.divf %5, %6 : vector<5x1xf32>
    %8 = vector.broadcast %7 : vector<5x1xf32> to vector<5x32xf32>
    %9 = arith.subf %1, %8 : vector<5x32xf32>
    %10 = arith.mulf %9, %9 : vector<5x32xf32>
    %cst_7 = arith.constant dense<0.000000e+00> : vector<5xf32>
    %11 = vector.multi_reduction <add>, %10, %cst_7 [1] : vector<5x32xf32> to vector<5xf32>
    %12 = vector.shape_cast %11 : vector<5xf32> to vector<5x1xf32>
    %cst_8 = arith.constant 3.200000e+01 : f32
    %13 = vector.broadcast %cst_8 : f32 to vector<5x1xf32>
    %14 = arith.divf %12, %13 : vector<5x1xf32>
    %cst_9 = arith.constant 9.99999974E-6 : f32
    %15 = vector.broadcast %cst_9 : f32 to vector<5x1xf32>
    %16 = arith.addf %14, %15 : vector<5x1xf32>
    %17 = math.rsqrt %16 : vector<5x1xf32>
    %18 = vector.broadcast %17 : vector<5x1xf32> to vector<5x32xf32>
    %19 = arith.mulf %9, %18 : vector<5x32xf32>
    %20 = vector.broadcast %2 : vector<1x32xf32> to vector<5x32xf32>
    %21 = arith.mulf %19, %20 : vector<5x32xf32>
    %22 = vector.broadcast %3 : vector<1x32xf32> to vector<5x32xf32>
    %23 = arith.addf %21, %22 : vector<5x32xf32>
    %24 = arith.truncf %23 : vector<5x32xf32> to vector<5x32xbf16>
    %c0_10 = arith.constant 0 : index
    %c0_11 = arith.constant 0 : index
    %25 = vector.load %arg4[%c0_10, %c0_11] : memref<32x96xbf16, #tpu.memory_space<vmem>>, vector<32x96xbf16>
    %cst_12 = arith.constant dense<0.000000e+00> : vector<5x96xf32>
    %26 = tpu.matmul %24, %25, %cst_12 {dimension_numbers = #tpu.dot_dimension_numbers<[1], [0], [0], [1], [0, 0, 1, 1], [], []>} : vector<5x32xbf16>, vector<32x96xbf16>, vector<5x96xf32> -> vector<5x96xf32>
    %c0_13 = arith.constant 0 : index
    %c0_14 = arith.constant 0 : index
    %27 = vector.load %arg5[%c0_13, %c0_14] : memref<1x96xf32, #tpu.memory_space<vmem>>, vector<1x96xf32>
    %28 = vector.broadcast %27 : vector<1x96xf32> to vector<5x96xf32>
    %29 = arith.addf %26, %28 : vector<5x96xf32>
    %30 = vector.extract_strided_slice %29 {offsets = [0, 0], sizes = [5, 32], strides = [1, 1]} : vector<5x96xf32> to vector<5x32xf32>
    %31 = vector.extract_strided_slice %29 {offsets = [0, 32], sizes = [5, 32], strides = [1, 1]} : vector<5x96xf32> to vector<5x32xf32>
    %32 = vector.extract_strided_slice %29 {offsets = [0, 64], sizes = [5, 32], strides = [1, 1]} : vector<5x96xf32> to vector<5x32xf32>
    %33 = vector.extract_strided_slice %30 {offsets = [0, 0], sizes = [5, 8], strides = [1, 1]} : vector<5x32xf32> to vector<5x8xf32>
    %34 = arith.truncf %33 : vector<5x8xf32> to vector<5x8xbf16>
    %35 = vector.extract_strided_slice %31 {offsets = [0, 0], sizes = [5, 8], strides = [1, 1]} : vector<5x32xf32> to vector<5x8xf32>
    %36 = arith.truncf %35 : vector<5x8xf32> to vector<5x8xbf16>
    %37 = vector.extract_strided_slice %32 {offsets = [0, 0], sizes = [5, 8], strides = [1, 1]} : vector<5x32xf32> to vector<5x8xf32>
    %38 = arith.truncf %37 : vector<5x8xf32> to vector<5x8xbf16>
    "tpu.trace_start"() <{level = 10 : i32, message = "ld,md->lm"}> : () -> ()
    %cst_15 = arith.constant dense<0.000000e+00> : vector<5x5xf32>
    %39 = tpu.matmul %34, %36, %cst_15 {dimension_numbers = #tpu.dot_dimension_numbers<[1], [1], [0], [0], [0, 0, 1, 0], [], []>} : vector<5x8xbf16>, vector<5x8xbf16>, vector<5x5xf32> -> vector<5x5xf32>
    "tpu.trace_stop"() : () -> ()
    %cst_16 = arith.constant dense<0xFF800000> : vector<5xf32>
    %40 = vector.multi_reduction <maximumf>, %39, %cst_16 [1] : vector<5x5xf32> to vector<5xf32>
    %41 = vector.shape_cast %40 : vector<5xf32> to vector<5x1xf32>
    %42 = vector.broadcast %41 : vector<5x1xf32> to vector<5x5xf32>
    %43 = arith.subf %39, %42 : vector<5x5xf32>
    %44 = math.exp %43 : vector<5x5xf32>
    %cst_17 = arith.constant dense<0.000000e+00> : vector<5xf32>
    %45 = vector.multi_reduction <add>, %44, %cst_17 [1] : vector<5x5xf32> to vector<5xf32>
    %46 = vector.shape_cast %45 : vector<5xf32> to vector<5x1xf32>
    %47 = tpu.reciprocal %46 {approx = true} : vector<5x1xf32> -> vector<5x1xf32>
    %48 = vector.broadcast %47 : vector<5x1xf32> to vector<5x5xf32>
    %49 = arith.mulf %44, %48 : vector<5x5xf32>
    %50 = arith.truncf %49 : vector<5x5xf32> to vector<5x5xbf16>
    "tpu.trace_start"() <{level = 10 : i32, message = "lm,md->ld"}> : () -> ()
    %cst_18 = arith.constant dense<0.000000e+00> : vector<5x8xf32>
    %51 = tpu.matmul %50, %38, %cst_18 {dimension_numbers = #tpu.dot_dimension_numbers<[1], [0], [0], [1], [0, 0, 1, 1], [], []>} : vector<5x5xbf16>, vector<5x8xbf16>, vector<5x8xf32> -> vector<5x8xf32>
    "tpu.trace_stop"() : () -> ()
    %52 = vector.extract_strided_slice %30 {offsets = [0, 8], sizes = [5, 8], strides = [1, 1]} : vector<5x32xf32> to vector<5x8xf32>
    %53 = arith.truncf %52 : vector<5x8xf32> to vector<5x8xbf16>
    %54 = vector.extract_strided_slice %31 {offsets = [0, 8], sizes = [5, 8], strides = [1, 1]} : vector<5x32xf32> to vector<5x8xf32>
    %55 = arith.truncf %54 : vector<5x8xf32> to vector<5x8xbf16>
    %56 = vector.extract_strided_slice %32 {offsets = [0, 8], sizes = [5, 8], strides = [1, 1]} : vector<5x32xf32> to vector<5x8xf32>
    %57 = arith.truncf %56 : vector<5x8xf32> to vector<5x8xbf16>
    "tpu.trace_start"() <{level = 10 : i32, message = "ld,md->lm"}> : () -> ()
    %cst_19 = arith.constant dense<0.000000e+00> : vector<5x5xf32>
    %58 = tpu.matmul %53, %55, %cst_19 {dimension_numbers = #tpu.dot_dimension_numbers<[1], [1], [0], [0], [0, 0, 1, 0], [], []>} : vector<5x8xbf16>, vector<5x8xbf16>, vector<5x5xf32> -> vector<5x5xf32>
    "tpu.trace_stop"() : () -> ()
    %cst_20 = arith.constant dense<0xFF800000> : vector<5xf32>
    %59 = vector.multi_reduction <maximumf>, %58, %cst_20 [1] : vector<5x5xf32> to vector<5xf32>
    %60 = vector.shape_cast %59 : vector<5xf32> to vector<5x1xf32>
    %61 = vector.broadcast %60 : vector<5x1xf32> to vector<5x5xf32>
    %62 = arith.subf %58, %61 : vector<5x5xf32>
    %63 = math.exp %62 : vector<5x5xf32>
    %cst_21 = arith.constant dense<0.000000e+00> : vector<5xf32>
    %64 = vector.multi_reduction <add>, %63, %cst_21 [1] : vector<5x5xf32> to vector<5xf32>
    %65 = vector.shape_cast %64 : vector<5xf32> to vector<5x1xf32>
    %66 = tpu.reciprocal %65 {approx = true} : vector<5x1xf32> -> vector<5x1xf32>
    %67 = vector.broadcast %66 : vector<5x1xf32> to vector<5x5xf32>
    %68 = arith.mulf %63, %67 : vector<5x5xf32>
    %69 = arith.truncf %68 : vector<5x5xf32> to vector<5x5xbf16>
    "tpu.trace_start"() <{level = 10 : i32, message = "lm,md->ld"}> : () -> ()
    %cst_22 = arith.constant dense<0.000000e+00> : vector<5x8xf32>
    %70 = tpu.matmul %69, %57, %cst_22 {dimension_numbers = #tpu.dot_dimension_numbers<[1], [0], [0], [1], [0, 0, 1, 1], [], []>} : vector<5x5xbf16>, vector<5x8xbf16>, vector<5x8xf32> -> vector<5x8xf32>
    "tpu.trace_stop"() : () -> ()
    %71 = vector.extract_strided_slice %30 {offsets = [0, 16], sizes = [5, 8], strides = [1, 1]} : vector<5x32xf32> to vector<5x8xf32>
    %72 = arith.truncf %71 : vector<5x8xf32> to vector<5x8xbf16>
    %73 = vector.extract_strided_slice %31 {offsets = [0, 16], sizes = [5, 8], strides = [1, 1]} : vector<5x32xf32> to vector<5x8xf32>
    %74 = arith.truncf %73 : vector<5x8xf32> to vector<5x8xbf16>
    %75 = vector.extract_strided_slice %32 {offsets = [0, 16], sizes = [5, 8], strides = [1, 1]} : vector<5x32xf32> to vector<5x8xf32>
    %76 = arith.truncf %75 : vector<5x8xf32> to vector<5x8xbf16>
    "tpu.trace_start"() <{level = 10 : i32, message = "ld,md->lm"}> : () -> ()
    %cst_23 = arith.constant dense<0.000000e+00> : vector<5x5xf32>
    %77 = tpu.matmul %72, %74, %cst_23 {dimension_numbers = #tpu.dot_dimension_numbers<[1], [1], [0], [0], [0, 0, 1, 0], [], []>} : vector<5x8xbf16>, vector<5x8xbf16>, vector<5x5xf32> -> vector<5x5xf32>
    "tpu.trace_stop"() : () -> ()
    %cst_24 = arith.constant dense<0xFF800000> : vector<5xf32>
    %78 = vector.multi_reduction <maximumf>, %77, %cst_24 [1] : vector<5x5xf32> to vector<5xf32>
    %79 = vector.shape_cast %78 : vector<5xf32> to vector<5x1xf32>
    %80 = vector.broadcast %79 : vector<5x1xf32> to vector<5x5xf32>
    %81 = arith.subf %77, %80 : vector<5x5xf32>
    %82 = math.exp %81 : vector<5x5xf32>
    %cst_25 = arith.constant dense<0.000000e+00> : vector<5xf32>
    %83 = vector.multi_reduction <add>, %82, %cst_25 [1] : vector<5x5xf32> to vector<5xf32>
    %84 = vector.shape_cast %83 : vector<5xf32> to vector<5x1xf32>
    %85 = tpu.reciprocal %84 {approx = true} : vector<5x1xf32> -> vector<5x1xf32>
    %86 = vector.broadcast %85 : vector<5x1xf32> to vector<5x5xf32>
    %87 = arith.mulf %82, %86 : vector<5x5xf32>
    %88 = arith.truncf %87 : vector<5x5xf32> to vector<5x5xbf16>
    "tpu.trace_start"() <{level = 10 : i32, message = "lm,md->ld"}> : () -> ()
    %cst_26 = arith.constant dense<0.000000e+00> : vector<5x8xf32>
    %89 = tpu.matmul %88, %76, %cst_26 {dimension_numbers = #tpu.dot_dimension_numbers<[1], [0], [0], [1], [0, 0, 1, 1], [], []>} : vector<5x5xbf16>, vector<5x8xbf16>, vector<5x8xf32> -> vector<5x8xf32>
    "tpu.trace_stop"() : () -> ()
    %90 = vector.extract_strided_slice %30 {offsets = [0, 24], sizes = [5, 8], strides = [1, 1]} : vector<5x32xf32> to vector<5x8xf32>
    %91 = arith.truncf %90 : vector<5x8xf32> to vector<5x8xbf16>
    %92 = vector.extract_strided_slice %31 {offsets = [0, 24], sizes = [5, 8], strides = [1, 1]} : vector<5x32xf32> to vector<5x8xf32>
    %93 = arith.truncf %92 : vector<5x8xf32> to vector<5x8xbf16>
    %94 = vector.extract_strided_slice %32 {offsets = [0, 24], sizes = [5, 8], strides = [1, 1]} : vector<5x32xf32> to vector<5x8xf32>
    %95 = arith.truncf %94 : vector<5x8xf32> to vector<5x8xbf16>
    "tpu.trace_start"() <{level = 10 : i32, message = "ld,md->lm"}> : () -> ()
    %cst_27 = arith.constant dense<0.000000e+00> : vector<5x5xf32>
    %96 = tpu.matmul %91, %93, %cst_27 {dimension_numbers = #tpu.dot_dimension_numbers<[1], [1], [0], [0], [0, 0, 1, 0], [], []>} : vector<5x8xbf16>, vector<5x8xbf16>, vector<5x5xf32> -> vector<5x5xf32>
    "tpu.trace_stop"() : () -> ()
    %cst_28 = arith.constant dense<0xFF800000> : vector<5xf32>
    %97 = vector.multi_reduction <maximumf>, %96, %cst_28 [1] : vector<5x5xf32> to vector<5xf32>
    %98 = vector.shape_cast %97 : vector<5xf32> to vector<5x1xf32>
    %99 = vector.broadcast %98 : vector<5x1xf32> to vector<5x5xf32>
    %100 = arith.subf %96, %99 : vector<5x5xf32>
    %101 = math.exp %100 : vector<5x5xf32>
    %cst_29 = arith.constant dense<0.000000e+00> : vector<5xf32>
    %102 = vector.multi_reduction <add>, %101, %cst_29 [1] : vector<5x5xf32> to vector<5xf32>
    %103 = vector.shape_cast %102 : vector<5xf32> to vector<5x1xf32>
    %104 = tpu.reciprocal %103 {approx = true} : vector<5x1xf32> -> vector<5x1xf32>
    %105 = vector.broadcast %104 : vector<5x1xf32> to vector<5x5xf32>
    %106 = arith.mulf %101, %105 : vector<5x5xf32>
    %107 = arith.truncf %106 : vector<5x5xf32> to vector<5x5xbf16>
    "tpu.trace_start"() <{level = 10 : i32, message = "lm,md->ld"}> : () -> ()
    %cst_30 = arith.constant dense<0.000000e+00> : vector<5x8xf32>
    %108 = tpu.matmul %107, %95, %cst_30 {dimension_numbers = #tpu.dot_dimension_numbers<[1], [0], [0], [1], [0, 0, 1, 1], [], []>} : vector<5x5xbf16>, vector<5x8xbf16>, vector<5x8xf32> -> vector<5x8xf32>
    "tpu.trace_stop"() : () -> ()
    %109 = tpu.concatenate %51, %70, %89, %108 in 1 : vector<5x8xf32>, vector<5x8xf32>, vector<5x8xf32>, vector<5x8xf32> -> vector<5x32xf32>
    %c0_31 = arith.constant 0 : index
    %c0_32 = arith.constant 0 : index
    %110 = vector.load %arg7[%c0_31, %c0_32] : memref<1x32xf32, #tpu.memory_space<vmem>>, vector<1x32xf32>
    %111 = vector.broadcast %110 : vector<1x32xf32> to vector<5x32xf32>
    %112 = arith.addf %1, %111 : vector<5x32xf32>
    %113 = arith.truncf %109 : vector<5x32xf32> to vector<5x32xbf16>
    %c0_33 = arith.constant 0 : index
    %c0_34 = arith.constant 0 : index
    %114 = vector.load %arg6[%c0_33, %c0_34] : memref<32x32xbf16, #tpu.memory_space<vmem>>, vector<32x32xbf16>
    %cst_35 = arith.constant dense<0.000000e+00> : vector<5x32xf32>
    %115 = tpu.matmul %113, %114, %cst_35 {dimension_numbers = #tpu.dot_dimension_numbers<[1], [0], [0], [1], [0, 0, 1, 1], [], []>} : vector<5x32xbf16>, vector<32x32xbf16>, vector<5x32xf32> -> vector<5x32xf32>
    %116 = arith.addf %112, %115 : vector<5x32xf32>
    %c0_36 = arith.constant 0 : index
    %c0_37 = arith.constant 0 : index
    %117 = vector.load %arg8[%c0_36, %c0_37] : memref<1x32xf32, #tpu.memory_space<vmem>>, vector<1x32xf32>
    %c0_38 = arith.constant 0 : index
    %c0_39 = arith.constant 0 : index
    %118 = vector.load %arg9[%c0_38, %c0_39] : memref<1x32xf32, #tpu.memory_space<vmem>>, vector<1x32xf32>
    %cst_40 = arith.constant dense<0.000000e+00> : vector<5xf32>
    %119 = vector.multi_reduction <add>, %116, %cst_40 [1] : vector<5x32xf32> to vector<5xf32>
    %120 = vector.shape_cast %119 : vector<5xf32> to vector<5x1xf32>
    %cst_41 = arith.constant 3.200000e+01 : f32
    %121 = vector.broadcast %cst_41 : f32 to vector<5x1xf32>
    %122 = arith.divf %120, %121 : vector<5x1xf32>
    %123 = vector.broadcast %122 : vector<5x1xf32> to vector<5x32xf32>
    %124 = arith.subf %116, %123 : vector<5x32xf32>
    %125 = arith.mulf %124, %124 : vector<5x32xf32>
    %cst_42 = arith.constant dense<0.000000e+00> : vector<5xf32>
    %126 = vector.multi_reduction <add>, %125, %cst_42 [1] : vector<5x32xf32> to vector<5xf32>
    %127 = vector.shape_cast %126 : vector<5xf32> to vector<5x1xf32>
    %cst_43 = arith.constant 3.200000e+01 : f32
    %128 = vector.broadcast %cst_43 : f32 to vector<5x1xf32>
    %129 = arith.divf %127, %128 : vector<5x1xf32>
    %cst_44 = arith.constant 9.99999974E-6 : f32
    %130 = vector.broadcast %cst_44 : f32 to vector<5x1xf32>
    %131 = arith.addf %129, %130 : vector<5x1xf32>
    %132 = math.rsqrt %131 : vector<5x1xf32>
    %133 = vector.broadcast %132 : vector<5x1xf32> to vector<5x32xf32>
    %134 = arith.mulf %124, %133 : vector<5x32xf32>
    %135 = vector.broadcast %117 : vector<1x32xf32> to vector<5x32xf32>
    %136 = arith.mulf %134, %135 : vector<5x32xf32>
    %137 = vector.broadcast %118 : vector<1x32xf32> to vector<5x32xf32>
    %138 = arith.addf %136, %137 : vector<5x32xf32>
    %139 = arith.truncf %138 : vector<5x32xf32> to vector<5x32xbf16>
    %c0_45 = arith.constant 0 : index
    %c0_46 = arith.constant 0 : index
    %140 = vector.load %arg10[%c0_45, %c0_46] : memref<32x128xbf16, #tpu.memory_space<vmem>>, vector<32x128xbf16>
    %cst_47 = arith.constant dense<0.000000e+00> : vector<5x128xf32>
    %141 = tpu.matmul %139, %140, %cst_47 {dimension_numbers = #tpu.dot_dimension_numbers<[1], [0], [0], [1], [0, 0, 1, 1], [], []>} : vector<5x32xbf16>, vector<32x128xbf16>, vector<5x128xf32> -> vector<5x128xf32>
    %c0_48 = arith.constant 0 : index
    %c0_49 = arith.constant 0 : index
    %142 = vector.load %arg11[%c0_48, %c0_49] : memref<1x128xf32, #tpu.memory_space<vmem>>, vector<1x128xf32>
    %143 = vector.broadcast %142 : vector<1x128xf32> to vector<5x128xf32>
    %144 = arith.addf %141, %143 : vector<5x128xf32>
    %cst_50 = arith.constant 1.702000e+00 : f32
    %145 = vector.broadcast %cst_50 : f32 to vector<5x128xf32>
    %146 = arith.mulf %145, %144 : vector<5x128xf32>
    %147 = arith.negf %146 : vector<5x128xf32>
    %148 = math.exp %147 : vector<5x128xf32>
    %cst_51 = arith.constant 1.000000e+00 : f32
    %149 = vector.broadcast %cst_51 : f32 to vector<5x128xf32>
    %150 = arith.addf %149, %148 : vector<5x128xf32>
    %151 = arith.divf %149, %150 : vector<5x128xf32>
    %152 = arith.mulf %144, %151 : vector<5x128xf32>
    %153 = arith.truncf %152 : vector<5x128xf32> to vector<5x128xbf16>
    %c0_52 = arith.constant 0 : index
    %c0_53 = arith.constant 0 : index
    %154 = vector.load %arg12[%c0_52, %c0_53] : memref<128x32xbf16, #tpu.memory_space<vmem>>, vector<128x32xbf16>
    %cst_54 = arith.constant dense<0.000000e+00> : vector<5x32xf32>
    %155 = tpu.matmul %153, %154, %cst_54 {dimension_numbers = #tpu.dot_dimension_numbers<[1], [0], [0], [1], [0, 0, 1, 1], [], []>} : vector<5x128xbf16>, vector<128x32xbf16>, vector<5x32xf32> -> vector<5x32xf32>
    %156 = arith.addf %116, %155 : vector<5x32xf32>
    %c0_55 = arith.constant 0 : index
    %c0_56 = arith.constant 0 : index
    %157 = vector.load %arg13[%c0_55, %c0_56] : memref<1x32xf32, #tpu.memory_space<vmem>>, vector<1x32xf32>
    %158 = vector.broadcast %157 : vector<1x32xf32> to vector<5x32xf32>
    %159 = arith.addf %156, %158 : vector<5x32xf32>
    %c0_57 = arith.constant 0 : index
    %c0_58 = arith.constant 0 : index
    %c0_59 = arith.constant 0 : index
    %160 = vector.load %arg14[%c0_57, %c0_58, %c0_59] : memref<1x5x32xf32, #tpu.memory_space<vmem>>, vector<1x5x32xf32>
    %161 = vector.shape_cast %160 : vector<1x5x32xf32> to vector<5x32xf32>
    %162 = vector.shape_cast %159 : vector<5x32xf32> to vector<1x5x32xf32>
    tpu.vector_store %arg14[%c0_57, %c0_58, %c0_59], %162 {strides = array<i32>} : memref<1x5x32xf32, #tpu.memory_space<vmem>>, vector<1x5x32xf32>,
    return
  }
  func.func @transform_0(%arg0: i32) -> (i32, i32, i32) {
    %c0_i32 = arith.constant 0 : i32
    %c0_i32_0 = arith.constant 0 : i32
    %c0_i32_1 = arith.constant 0 : i32
    return %arg0, %c0_i32, %c0_i32_0 : i32, i32, i32
  }
  func.func @transform_1(%arg0: i32) -> (i32, i32) {
    %c0_i32 = arith.constant 0 : i32
    %c0_i32_0 = arith.constant 0 : i32
    %c0_i32_1 = arith.constant 0 : i32
    return %c0_i32, %c0_i32_0 : i32, i32
  }
  func.func @transform_2(%arg0: i32) -> (i32, i32) {
    %c0_i32 = arith.constant 0 : i32
    %c0_i32_0 = arith.constant 0 : i32
    %c0_i32_1 = arith.constant 0 : i32
    return %c0_i32, %c0_i32_0 : i32, i32
  }
  func.func @transform_3(%arg0: i32) -> (i32, i32) {
    %c0_i32 = arith.constant 0 : i32
    %c0_i32_0 = arith.constant 0 : i32
    %c0_i32_1 = arith.constant 0 : i32
    return %c0_i32, %c0_i32_0 : i32, i32
  }
  func.func @transform_4(%arg0: i32) -> (i32, i32) {
    %c0_i32 = arith.constant 0 : i32
    %c0_i32_0 = arith.constant 0 : i32
    %c0_i32_1 = arith.constant 0 : i32
    return %c0_i32, %c0_i32_0 : i32, i32
  }
  func.func @transform_5(%arg0: i32) -> (i32, i32) {
    %c0_i32 = arith.constant 0 : i32
    %c0_i32_0 = arith.constant 0 : i32
    %c0_i32_1 = arith.constant 0 : i32
    return %c0_i32, %c0_i32_0 : i32, i32
  }
  func.func @transform_6(%arg0: i32) -> (i32, i32) {
    %c0_i32 = arith.constant 0 : i32
    %c0_i32_0 = arith.constant 0 : i32
    %c0_i32_1 = arith.constant 0 : i32
    return %c0_i32, %c0_i32_0 : i32, i32
  }
  func.func @transform_7(%arg0: i32) -> (i32, i32) {
    %c0_i32 = arith.constant 0 : i32
    %c0_i32_0 = arith.constant 0 : i32
    %c0_i32_1 = arith.constant 0 : i32
    return %c0_i32, %c0_i32_0 : i32, i32
  }
  func.func @transform_8(%arg0: i32) -> (i32, i32) {
    %c0_i32 = arith.constant 0 : i32
    %c0_i32_0 = arith.constant 0 : i32
    %c0_i32_1 = arith.constant 0 : i32
    return %c0_i32, %c0_i32_0 : i32, i32
  }
  func.func @transform_9(%arg0: i32) -> (i32, i32) {
    %c0_i32 = arith.constant 0 : i32
    %c0_i32_0 = arith.constant 0 : i32
    %c0_i32_1 = arith.constant 0 : i32
    return %c0_i32, %c0_i32_0 : i32, i32
  }
  func.func @transform_10(%arg0: i32) -> (i32, i32) {
    %c0_i32 = arith.constant 0 : i32
    %c0_i32_0 = arith.constant 0 : i32
    %c0_i32_1 = arith.constant 0 : i32
    return %c0_i32, %c0_i32_0 : i32, i32
  }
  func.func @transform_11(%arg0: i32) -> (i32, i32) {
    %c0_i32 = arith.constant 0 : i32
    %c0_i32_0 = arith.constant 0 : i32
    %c0_i32_1 = arith.constant 0 : i32
    return %c0_i32, %c0_i32_0 : i32, i32
  }
  func.func @transform_12(%arg0: i32) -> (i32, i32) {
    %c0_i32 = arith.constant 0 : i32
    %c0_i32_0 = arith.constant 0 : i32
    %c0_i32_1 = arith.constant 0 : i32
    return %c0_i32, %c0_i32_0 : i32, i32
  }
  func.func @transform_13(%arg0: i32) -> (i32, i32, i32) {
    %c0_i32 = arith.constant 0 : i32
    %c0_i32_0 = arith.constant 0 : i32
    %c0_i32_1 = arith.constant 0 : i32
    return %arg0, %c0_i32, %c0_i32_0 : i32, i32, i32
  }
}

module attributes {stable_mosaic.version = 11 : i64} {
  func.func @kernel(%arg0: memref<2x32xf32, #tpu.memory_space<vmem>>, %arg1: memref<1x32xf32, #tpu.memory_space<vmem>>, %arg2: memref<1x32xf32, #tpu.memory_space<vmem>>, %arg3: memref<32x16xbf16, #tpu.memory_space<vmem>>, %arg4: memref<2x16xf32, #tpu.memory_space<vmem>>) attributes {dimension_semantics = [], scalar_prefetch = 0 : i64, scratch_operands = 0 : i64, tpu.core_type = #tpu.core_type<tc>} {
    %c0 = arith.constant 0 : index
    %c0_0 = arith.constant 0 : index
    %0 = vector.load %arg0[%c0, %c0_0] : memref<2x32xf32, #tpu.memory_space<vmem>>, vector<2x32xf32>
    %c0_1 = arith.constant 0 : index
    %c0_2 = arith.constant 0 : index
    %1 = vector.load %arg1[%c0_1, %c0_2] : memref<1x32xf32, #tpu.memory_space<vmem>>, vector<1x32xf32>
    %c0_3 = arith.constant 0 : index
    %c0_4 = arith.constant 0 : index
    %2 = vector.load %arg2[%c0_3, %c0_4] : memref<1x32xf32, #tpu.memory_space<vmem>>, vector<1x32xf32>
    %cst = arith.constant dense<0.000000e+00> : vector<2xf32>
    %3 = vector.multi_reduction <add>, %0, %cst [1] : vector<2x32xf32> to vector<2xf32>
    %4 = vector.shape_cast %3 : vector<2xf32> to vector<2x1xf32>
    %cst_5 = arith.constant 3.200000e+01 : f32
    %5 = vector.broadcast %cst_5 : f32 to vector<2x1xf32>
    %6 = arith.divf %4, %5 : vector<2x1xf32>
    %7 = vector.broadcast %6 : vector<2x1xf32> to vector<2x32xf32>
    %8 = arith.subf %0, %7 : vector<2x32xf32>
    %9 = arith.mulf %8, %8 : vector<2x32xf32>
    %cst_6 = arith.constant dense<0.000000e+00> : vector<2xf32>
    %10 = vector.multi_reduction <add>, %9, %cst_6 [1] : vector<2x32xf32> to vector<2xf32>
    %11 = vector.shape_cast %10 : vector<2xf32> to vector<2x1xf32>
    %cst_7 = arith.constant 3.200000e+01 : f32
    %12 = vector.broadcast %cst_7 : f32 to vector<2x1xf32>
    %13 = arith.divf %11, %12 : vector<2x1xf32>
    %cst_8 = arith.constant 9.99999974E-6 : f32
    %14 = vector.broadcast %cst_8 : f32 to vector<2x1xf32>
    %15 = arith.addf %13, %14 : vector<2x1xf32>
    %16 = math.rsqrt %15 : vector<2x1xf32>
    %17 = vector.broadcast %16 : vector<2x1xf32> to vector<2x32xf32>
    %18 = arith.mulf %8, %17 : vector<2x32xf32>
    %19 = vector.broadcast %1 : vector<1x32xf32> to vector<2x32xf32>
    %20 = arith.mulf %18, %19 : vector<2x32xf32>
    %21 = vector.broadcast %2 : vector<1x32xf32> to vector<2x32xf32>
    %22 = arith.addf %20, %21 : vector<2x32xf32>
    %23 = arith.truncf %22 : vector<2x32xf32> to vector<2x32xbf16>
    %c0_9 = arith.constant 0 : index
    %c0_10 = arith.constant 0 : index
    %24 = vector.load %arg3[%c0_9, %c0_10] : memref<32x16xbf16, #tpu.memory_space<vmem>>, vector<32x16xbf16>
    %cst_11 = arith.constant dense<0.000000e+00> : vector<2x16xf32>
    %25 = tpu.matmul %23, %24, %cst_11 {dimension_numbers = #tpu.dot_dimension_numbers<[1], [0], [0], [1], [0, 0, 1, 1], [], []>} : vector<2x32xbf16>, vector<32x16xbf16>, vector<2x16xf32> -> vector<2x16xf32>
    %c0_12 = arith.constant 0 : index
    %c0_13 = arith.constant 0 : index
    %26 = vector.load %arg4[%c0_12, %c0_13] : memref<2x16xf32, #tpu.memory_space<vmem>>, vector<2x16xf32>
    tpu.vector_store %arg4[%c0_12, %c0_13], %25 {strides = array<i32>} : memref<2x16xf32, #tpu.memory_space<vmem>>, vector<2x16xf32>,
    return
  }
}

</mosaic_0001>

<llo_original>
// kernel: _lambda_.7
$region0: #{_lambda_.7}
  #allocation0 [shape = 'u32[]', space=smem, size = 0x4, offset = 0x4, fixed_abs, tag = 'smem constant byte address 0x4 - core index']
  #allocation1 [shape = 'u32[144,128]{1,0:T(1,128)}', space=vmem, size = 0x12000, scoped, tag = 'internal scratch']
  %s0 = inlined_call_operand.vmem [shape: f32[2,32], index: 0, kind: input, shape index: {}]
  %s1 = inlined_call_operand.vmem [shape: f32[1,32], index: 1, kind: input, shape index: {}]
  %s2 = inlined_call_operand.vmem [shape: f32[1,32], index: 2, kind: input, shape index: {}]
  %s3 = inlined_call_operand.vmem [shape: bf16[32,16], index: 3, kind: input, shape index: {}]
  %s4 = inlined_call_operand.hbm [shape: f32[2,16], index: 4, kind: output, shape index: {}]
  %s5 = sld [smem:[#allocation0]]
  $region26: #{_lambda_.7} parent=0
    _
  %s7 = ssub.s32 1, %s5
  %s8 = scalar_select 0, %s7, %s5
  $region1: #{_lambda_.7} parent=0
    #allocation2 [shape = 'u8[1024]{0}', space=vmem, size = 0x400, scoped, tag = 'output window, operand 0, single buffered']
    #allocation3 [shape = 's32[1]{0}', space=sflag, size = 0x4, scoped, tag = 'scoped memory for _lambda_.7']
    %9 = vsyncpa [#allocation3], 0
    // Predicated region
    $region2: #{_lambda_.7} parent=1 // pred_check
      _
    $region3: #{_lambda_.7} parent=1 // pred_check_branch
      %11 = sbr.rel (0) target = $region5
    $region4: #{_lambda_.7} parent=1 // pred_region
      _
    $region5: #{_lambda_.7} parent=1 // pred_fallthru
      _
    // Predicated region
    $region6: #{_lambda_.7} parent=1 // pred_check
      _
    $region7: #{_lambda_.7} parent=1 // pred_check_branch
      %13 = sbr.rel (0) target = $region9
    $region8: #{_lambda_.7} parent=1 // pred_region
      _
    $region9: #{_lambda_.7} parent=1 // pred_fallthru
      _
    // Predicated region
    $region10: #{_lambda_.7} parent=1 // pred_check
      _
    $region11: #{_lambda_.7} parent=1 // pred_check_branch
      %15 = sbr.rel (0) target = $region13
    $region12: #{_lambda_.7} parent=1 // pred_region
      _
    $region13: #{_lambda_.7} parent=1 // pred_fallthru
      _
    // Predicated region
    $region14: #{_lambda_.7} parent=1 // pred_check
      _
    $region15: #{_lambda_.7} parent=1 // pred_check_branch
      %17 = sbr.rel (0) target = $region17
    $region16: #{_lambda_.7} parent=1 // pred_region
      _
    $region17: #{_lambda_.7} parent=1 // pred_fallthru
      _
    %v19 = vld [vmem:[%s0] sm:$0x3]
    %v20 = vld [vmem:[%s1] sm:$0x1]
    %v21 = vld [vmem:[%s2] sm:$0x1]
    %vm22 = vcmask 254976
    %v23 = vsel %vm22, %v19, 0.0
    %24 = vadd.xlane.f32.xlu0 %v23
    %v25 = vpop.xlane.xlu0 %24
    %v26 = vrcp.pop 32.0
    %v27 = vmul.f32 %v25, %v26
    %v28 = vsub.f32 %v19, %v27
    %v29 = vmul.f32 %v28, %v28
    %v30 = vsel %vm22, %v29, 0.0
    %31 = vadd.xlane.f32.xlu0 %v30
    %v32 = vpop.xlane.xlu0 %31
    %v33 = vmul.f32 %v32, %v26
    %v34 = vadd.f32 %v33, 1e-05
    %v35 = vrsqrt.pop %v34
    %v36 = vmul.f32 %v28, %v35
    %v38 = vlaneseq
    %v39 = vshrl.u32 %v38, 7
    %v40 = vsub.s32 0, %v39
    %v41 = vrot.slane %v20, %v40
    %v43 = vmul.f32 %v36, %v41
    %v45 = vlaneseq
    %v46 = vshrl.u32 %v45, 7
    %v47 = vsub.s32 0, %v46
    %v48 = vrot.slane %v21, %v47
    %v50 = vadd.f32 %v43, %v48
    %v51 = vpack.c.bf16 %v50, %v50
    %v52 = vld [vmem:[%s3] sm:$0xf]
    %v53 = vld [vmem:[%s3 + $0x4] sm:$0xf]
    %v54 = vld [vmem:[%s3 + $0x8] sm:$0xf]
    %v55 = vld [vmem:[%s3 + $0xc] sm:$0xf]
    %v60 = vunpack.c.l.b16 %v52
    %v61 = vunpack.c.l.b16 %v53
    %v62 = vunpack.c.l.b16 %v54
    %v63 = vunpack.c.l.b16 %v55
    %v64 = vpack.c.b16 %v61, %v60
    %v65 = vpack.c.b16 %v63, %v62
    %vm68 = vcmask 261120
    %v70 = vsel %vm68, %v51, 0
    %72 = vmatprep.subr.bf16.mxu0 0
    %73 = vmatpush1.bf16.msra.mxu0 %v64
    %74 = vmatprep.subr.bf16.mxu0 0
    %75 = vmatpush1.bf16.msra.mxu0 %v65
    %76 = vmatprep.subr.bf16.mxu0 0
    %77 = vmatpush1.bf16.msra.mxu0 0
    %78 = vmatprep.subr.bf16.mxu0 0
    %79 = vmatpush1.bf16.msra.mxu0 0
    %80 = vmatprep.subr.bf16.mxu0 0
    %81 = vmatpush1.bf16.msra.mxu0 0
    %82 = vmatprep.subr.bf16.mxu0 0
    %83 = vmatpush1.bf16.msra.mxu0 0
    %84 = vmatprep.subr.bf16.mxu0 0
    %85 = vmatpush1.bf16.msra.mxu0 0
    %86 = vmatprep.subr.bf16.mxu0 0
    %87 = vmatpush1.bf16.msra.mxu0 0
    %88 = vmatprep.subr.bf16.mxu0 0
    %89 = vmatpush1.bf16.msra.mxu0 0
    %90 = vmatprep.subr.bf16.mxu0 0
    %91 = vmatpush1.bf16.msra.mxu0 0
    %92 = vmatprep.subr.bf16.mxu0 0
    %93 = vmatpush1.bf16.msra.mxu0 0
    %94 = vmatprep.subr.bf16.mxu0 0
    %95 = vmatpush1.bf16.msra.mxu0 0
    %96 = vmatprep.subr.bf16.mxu0 0
    %97 = vmatpush1.bf16.msra.mxu0 0
    %98 = vmatprep.subr.bf16.mxu0 0
    %99 = vmatpush1.bf16.msra.mxu0 0
    %100 = vmatprep.subr.bf16.mxu0 0
    %101 = vmatpush1.bf16.msra.mxu0 0
    %102 = vmatprep.subr.bf16.mxu0 0
    %103 = vmatpush1.bf16.msra.mxu0 0
    %104 = vmatprep.mubr.bf16.mxu0 0
    %105 = vmatmul.mubr.bf16.gmra.mrb[0].mxu0 %v70
    %v106 = vpop.f32.mrb[0].mxu0
    %v107 = vadd.f32 0.0, %v106
    %v108 = vpop.f32.mrb[0].mxu0
    %v109 = vpop.f32.mrb[0].mxu0
    %v110 = vpop.f32.mrb[0].mxu0
    %111 = vdwg.mxu0
    %vm112 = vcmask 123904
    %113 = vst.msk [vmem:[#allocation2] sm:$0x3] %vm112, %v107
    // Predicated region
    $region18: #{_lambda_.7} parent=1 // pred_check
      _
    $region19: #{_lambda_.7} parent=1 // pred_check_branch
      %115 = sbr.rel (0) target = $region21
    $region20: #{_lambda_.7} parent=1 // pred_region
      %s117 = ssub.s32 32, 32
      %118 = vsyncadd [#allocation3], %s117
      %s120 = sshll.u32 [#allocation2], 4
      %s121 = int_to_ptr.vmem [resolvable:$true] %s120
      %123 = dma.vmem_to_hbm [thread:$0]  %s121, 32, %s4, [#allocation3]
    $region21: #{_lambda_.7} parent=1 // pred_fallthru
      _
    // Predicated region
    $region22: #{_lambda_.7} parent=1 // pred_check
      _
    $region23: #{_lambda_.7} parent=1 // pred_check_branch
      %125 = sbr.rel (0) target = $region25
    $region24: #{_lambda_.7} parent=1 // pred_region
      %126 = dma.done [#allocation3], 32
    $region25: #{_lambda_.7} parent=1 // pred_fallthru
      _
    %127 = vsyncpa [#allocation3], 1

// kernel: _lambda_.4
$region0: #{_lambda_.4}
  #allocation0 [shape = 'u32[]', space=smem, size = 0x4, offset = 0x4, fixed_abs, tag = 'smem constant byte address 0x4 - core index']
  #allocation1 [shape = 'u32[144,128]{1,0:T(1,128)}', space=vmem, size = 0x12000, scoped, tag = 'internal scratch']
  %s0 = inlined_call_operand.vmem [shape: bf16[2,4,256], index: 0, kind: input, shape index: {}]
  %s1 = inlined_call_operand.vmem [shape: bf16[256,32], index: 1, kind: input, shape index: {}]
  %s2 = inlined_call_operand.vmem [shape: f32[1,32], index: 2, kind: input, shape index: {}]
  %s3 = inlined_call_operand.vmem [shape: f32[5,32], index: 3, kind: input, shape index: {}]
  %s4 = inlined_call_operand.vmem [shape: f32[1,32], index: 4, kind: input, shape index: {}]
  %s5 = inlined_call_operand.vmem [shape: f32[1,32], index: 5, kind: input, shape index: {}]
  %s6 = inlined_call_operand.vmem [shape: f32[2,5,32], index: 6, kind: output, shape index: {}]
  %s7 = sld [smem:[#allocation0]]
  $region57: #{_lambda_.4} parent=0
    _
  %s9 = ssub.s32 1, %s7
  %s10 = scalar_select 0, %s9, %s7
  loop: start=0, step=1, limit=4
  $region2: #{_lambda_.4} parent=0 // loop_pre_header
    _
  $region3: #{_lambda_.4} parent=0 // loop_header
    %s12 = sphi 0, %s16
    %p13 = scmp.ge.s32.totalorder %s12, 4
    %s22 = sphi 0, %s24
    %s25 = sphi 0, %s22
    %s26 = sphi 0, %s25
    %s42 = sphi 0, %s26
    %s46 = sphi 0, %s46
    %s48 = sphi 0, %s46
    %s49 = sphi 0, %s48
    %s63 = sphi 0, %s49
    %s67 = sphi 0, %s67
    %s69 = sphi 0, %s67
    %s70 = sphi 0, %s69
    %s84 = sphi 0, %s70
    %s88 = sphi 0, %s88
    %s90 = sphi 0, %s88
    %s91 = sphi 0, %s90
    %s105 = sphi 0, %s91
    %s109 = sphi 0, %s109
    %s111 = sphi 0, %s109
    %s112 = sphi 0, %s111
    %s126 = sphi 0, %s112
    %s130 = sphi 0, %s130
    %s132 = sphi 0, %s130
    %s133 = sphi 0, %s132
    %s147 = sphi 0, %s133
    %s153 = sphi 0, %s155
    %s156 = sphi 0, %s153
    %s157 = sphi 0, %s156
    %s173 = sphi 0, %s157
  $region4: #{_lambda_.4} parent=0 // loop_header_branch
    %15 = sbr.rel (%p13) target = $region8
  $region5: #{_lambda_.4} parent=0 // loop_body
    %s17 = ssub.s32 %s12, 1
    %s18 = ssub.s32 %s12, 2
    %s19 = sadd.s32 %s12, 1
    %s20 = ssub.s32 %s12, %s19
    %p21 = scmp.eq.s32.totalorder %s20, 0
    %s23 = sadd.s32 %s22, 1
    %s24 = scalar_select %p21, %s22, %s23
    %p27 = pneg %p21
    %p28 = scmp.eq.s32.totalorder %s12, 1
    %p29 = por %p27, %p28
    %p30 = scmp.ne.s32.totalorder %s22, %s25
    %p31 = scmp.eq.s32.totalorder %s12, 0
    %p32 = por %p30, %p31
    %p33 = scmp.ne.s32.totalorder %s22, %s25
    %p34 = scmp.eq.s32.totalorder %s17, 1
    %p35 = por %p33, %p34
    %p36 = scmp.ne.s32.totalorder %s25, %s26
    %p37 = scmp.eq.s32.totalorder %s17, 0
    %p38 = por %p36, %p37
    %p39 = scmp.ne.s32.totalorder %s25, %s26
    %p40 = scmp.eq.s32.totalorder %s18, 1
    %p41 = por %p39, %p40
    %p43 = scmp.ne.s32.totalorder %s26, %s42
    %p44 = scmp.eq.s32.totalorder %s18, 0
    %p45 = por %p43, %p44
    %s47 = sadd.s32 %s46, 1
    %p50 = scmp.eq.s32.totalorder %s12, 1
    %p51 = scmp.ne.s32.totalorder %s46, %s48
    %p52 = scmp.eq.s32.totalorder %s12, 0
    %p53 = por %p51, %p52
    %p54 = scmp.ne.s32.totalorder %s46, %s48
    %p55 = scmp.eq.s32.totalorder %s17, 1
    %p56 = por %p54, %p55
    %p57 = scmp.ne.s32.totalorder %s48, %s49
    %p58 = scmp.eq.s32.totalorder %s17, 0
    %p59 = por %p57, %p58
    %p60 = scmp.ne.s32.totalorder %s48, %s49
    %p61 = scmp.eq.s32.totalorder %s18, 1
    %p62 = por %p60, %p61
    %p64 = scmp.ne.s32.totalorder %s49, %s63
    %p65 = scmp.eq.s32.totalorder %s18, 0
    %p66 = por %p64, %p65
    %s68 = sadd.s32 %s67, 1
    %p71 = scmp.eq.s32.totalorder %s12, 1
    %p72 = scmp.ne.s32.totalorder %s67, %s69
    %p73 = scmp.eq.s32.totalorder %s12, 0
    %p74 = por %p72, %p73
    %p75 = scmp.ne.s32.totalorder %s67, %s69
    %p76 = scmp.eq.s32.totalorder %s17, 1
    %p77 = por %p75, %p76
    %p78 = scmp.ne.s32.totalorder %s69, %s70
    %p79 = scmp.eq.s32.totalorder %s17, 0
    %p80 = por %p78, %p79
    %p81 = scmp.ne.s32.totalorder %s69, %s70
    %p82 = scmp.eq.s32.totalorder %s18, 1
    %p83 = por %p81, %p82
    %p85 = scmp.ne.s32.totalorder %s70, %s84
    %p86 = scmp.eq.s32.totalorder %s18, 0
    %p87 = por %p85, %p86
    %s89 = sadd.s32 %s88, 1
    %p92 = scmp.eq.s32.totalorder %s12, 1
    %p93 = scmp.ne.s32.totalorder %s88, %s90
    %p94 = scmp.eq.s32.totalorder %s12, 0
    %p95 = por %p93, %p94
    %p96 = scmp.ne.s32.totalorder %s88, %s90
    %p97 = scmp.eq.s32.totalorder %s17, 1
    %p98 = por %p96, %p97
    %p99 = scmp.ne.s32.totalorder %s90, %s91
    %p100 = scmp.eq.s32.totalorder %s17, 0
    %p101 = por %p99, %p100
    %p102 = scmp.ne.s32.totalorder %s90, %s91
    %p103 = scmp.eq.s32.totalorder %s18, 1
    %p104 = por %p102, %p103
    %p106 = scmp.ne.s32.totalorder %s91, %s105
    %p107 = scmp.eq.s32.totalorder %s18, 0
    %p108 = por %p106, %p107
    %s110 = sadd.s32 %s109, 1
    %p113 = scmp.eq.s32.totalorder %s12, 1
    %p114 = scmp.ne.s32.totalorder %s109, %s111
    %p115 = scmp.eq.s32.totalorder %s12, 0
    %p116 = por %p114, %p115
    %p117 = scmp.ne.s32.totalorder %s109, %s111
    %p118 = scmp.eq.s32.totalorder %s17, 1
    %p119 = por %p117, %p118
    %p120 = scmp.ne.s32.totalorder %s111, %s112
    %p121 = scmp.eq.s32.totalorder %s17, 0
    %p122 = por %p120, %p121
    %p123 = scmp.ne.s32.totalorder %s111, %s112
    %p124 = scmp.eq.s32.totalorder %s18, 1
    %p125 = por %p123, %p124
    %p127 = scmp.ne.s32.totalorder %s112, %s126
    %p128 = scmp.eq.s32.totalorder %s18, 0
    %p129 = por %p127, %p128
    %s131 = sadd.s32 %s130, 1
    %p134 = scmp.eq.s32.totalorder %s12, 1
    %p135 = scmp.ne.s32.totalorder %s130, %s132
    %p136 = scmp.eq.s32.totalorder %s12, 0
    %p137 = por %p135, %p136
    %p138 = scmp.ne.s32.totalorder %s130, %s132
    %p139 = scmp.eq.s32.totalorder %s17, 1
    %p140 = por %p138, %p139
    %p141 = scmp.ne.s32.totalorder %s132, %s133
    %p142 = scmp.eq.s32.totalorder %s17, 0
    %p143 = por %p141, %p142
    %p144 = scmp.ne.s32.totalorder %s132, %s133
    %p145 = scmp.eq.s32.totalorder %s18, 1
    %p146 = por %p144, %p145
    %p148 = scmp.ne.s32.totalorder %s133, %s147
    %p149 = scmp.eq.s32.totalorder %s18, 0
    %p150 = por %p148, %p149
    %s151 = ssub.s32 %s12, %s19
    %p152 = scmp.eq.s32.totalorder %s151, 0
    %s154 = sadd.s32 %s153, 1
    %s155 = scalar_select %p152, %s153, %s154
    %p158 = pneg %p152
    %p159 = scmp.eq.s32.totalorder %s12, 1
    %p160 = por %p158, %p159
    %p161 = scmp.ne.s32.totalorder %s153, %s156
    %p162 = scmp.eq.s32.totalorder %s12, 0
    %p163 = por %p161, %p162
    %p164 = scmp.ne.s32.totalorder %s153, %s156
    %p165 = scmp.eq.s32.totalorder %s17, 1
    %p166 = por %p164, %p165
    %p167 = scmp.ne.s32.totalorder %s156, %s157
    %p168 = scmp.eq.s32.totalorder %s17, 0
    %p169 = por %p167, %p168
    %p170 = scmp.ne.s32.totalorder %s156, %s157
    %p171 = scmp.eq.s32.totalorder %s18, 1
    %p172 = por %p170, %p171
    %p174 = scmp.ne.s32.totalorder %s157, %s173
    %p175 = scmp.eq.s32.totalorder %s18, 0
    %p176 = por %p174, %p175
    %p177 = scmp.le.s32.totalorder 1, %s12
    %p178 = scmp.lt.s32.totalorder %s12, 3
    %p179 = pnand %p177, %p178
    %p180 = pneg %p179
    // Predicated region
    $region9: #{_lambda_.4} parent=5 // pred_check
      _
    $region10: #{_lambda_.4} parent=5 // pred_check_branch
      %182 = sbr.rel (%p179) target = $region12
    $region11: #{_lambda_.4} parent=5 // pred_region
      %s183 = ssub.s32 %s12, 1
      // Predicated region
      $region13: #{_lambda_.4} parent=11 // pred_check
        %p184 = pneg %p59
      $region14: #{_lambda_.4} parent=11 // pred_check_branch
        %186 = sbr.rel (%p184) target = $region16
      $region15: #{_lambda_.4} parent=11 // pred_region
        _
      $region16: #{_lambda_.4} parent=11 // pred_fallthru
        _
      // Predicated region
      $region17: #{_lambda_.4} parent=11 // pred_check
        %p187 = pneg %p80
      $region18: #{_lambda_.4} parent=11 // pred_check_branch
        %189 = sbr.rel (%p187) target = $region20
      $region19: #{_lambda_.4} parent=11 // pred_region
        _
      $region20: #{_lambda_.4} parent=11 // pred_fallthru
        _
      // Predicated region
      $region21: #{_lambda_.4} parent=11 // pred_check
        %p190 = pneg %p101
      $region22: #{_lambda_.4} parent=11 // pred_check_branch
        %192 = sbr.rel (%p190) target = $region24
      $region23: #{_lambda_.4} parent=11 // pred_region
        _
      $region24: #{_lambda_.4} parent=11 // pred_fallthru
        _
      // Predicated region
      $region25: #{_lambda_.4} parent=11 // pred_check
        %p193 = pneg %p122
      $region26: #{_lambda_.4} parent=11 // pred_check_branch
        %195 = sbr.rel (%p193) target = $region28
      $region27: #{_lambda_.4} parent=11 // pred_region
        _
      $region28: #{_lambda_.4} parent=11 // pred_fallthru
        _
      // Predicated region
      $region29: #{_lambda_.4} parent=11 // pred_check
        %p196 = pneg %p143
      $region30: #{_lambda_.4} parent=11 // pred_check_branch
        %198 = sbr.rel (%p196) target = $region32
      $region31: #{_lambda_.4} parent=11 // pred_region
        _
      $region32: #{_lambda_.4} parent=11 // pred_fallthru
        _
    $region12: #{_lambda_.4} parent=5 // pred_fallthru
      _
    %p199 = scmp.lt.s32.totalorder %s12, 2
    // Predicated region
    $region33: #{_lambda_.4} parent=5 // pred_check
      %p200 = pneg %p199
    $region34: #{_lambda_.4} parent=5 // pred_check_branch
      %202 = sbr.rel (%p200) target = $region36
    $region35: #{_lambda_.4} parent=5 // pred_region
      // Predicated region
      $region37: #{_lambda_.4} parent=35 // pred_check
        %p203 = pneg %p32
      $region38: #{_lambda_.4} parent=35 // pred_check_branch
        %205 = sbr.rel (%p203) target = $region40
      $region39: #{_lambda_.4} parent=35 // pred_region
        %p206 = scmp.lt.s32.totalorder %s12, 1
        %s207 = scalar_select %p206, %s12, 1
        %s208 = smul.addr %s207, 2
        %s209 = smul.addr %s208, 2
        %s210 = scalar_lea.vmem %s0, %s209
      $region40: #{_lambda_.4} parent=35 // pred_fallthru
        _
    $region36: #{_lambda_.4} parent=5 // pred_fallthru
      _
    %p211 = scmp.le.s32.totalorder 1, %s12
    %p212 = scmp.lt.s32.totalorder %s12, 3
    %p213 = pnand %p211, %p212
    %p214 = pneg %p213
    // Predicated region
    $region41: #{_lambda_.4} parent=5 // pred_check
      _
    $region42: #{_lambda_.4} parent=5 // pred_check_branch
      %216 = sbr.rel (%p213) target = $region44
    $region43: #{_lambda_.4} parent=5 // pred_region
      %s217 = ssub.s32 %s12, 1
      %p218 = scmp.lt.s32.totalorder %s17, 1
      %s219 = scalar_select %p218, %s17, 1
      %s220 = smul.addr %s219, 2
      %s221 = smul.addr %s220, 2
      %s222 = scalar_lea.vmem %s0, %s221
      %p223 = pneg %p38
      %p224 = pneg %p35
      %p225 = pneg %p59
      %p226 = pneg %p56
      %p227 = pneg %p80
      %p228 = pneg %p77
      %p229 = pneg %p101
      %p230 = pneg %p98
      %p231 = pneg %p122
      %p232 = pneg %p119
      %p233 = pneg %p143
      %p234 = pneg %p140
      %p235 = pneg %p169
      %p236 = pneg %p166
      %p237 = scmp.lt.s32.totalorder %s17, 1
      %s238 = scalar_select %p237, %s17, 1
      %s239 = smul.addr %s238, 8
      %s240 = scalar_lea.vmem %s6, %s239
      %p241 = scmp.lt.s32.totalorder %s17, 1
      %s242 = scalar_select %p241, %s17, 1
      %s243 = smul.addr %s242, 2
      %s244 = smul.addr %s243, 2
      %s245 = scalar_lea.vmem %s0, %s244
      %p246 = scmp.lt.s32.totalorder %s17, 1
      %s247 = scalar_select %p246, %s17, 1
      %s248 = smul.addr %s247, 8
      %s249 = scalar_lea.vmem %s6, %s248
      %v251 = vld [vmem:[%s245] sm:$0xf]
      %v252 = vld [vmem:[%s1] sm:$0xf]
      %v253 = vld [vmem:[%s1 + $0x4] sm:$0xf]
      %v254 = vld [vmem:[%s1 + $0x8] sm:$0xf]
      %v255 = vld [vmem:[%s1 + $0xc] sm:$0xf]
      %v256 = vld [vmem:[%s1 + $0x10] sm:$0xf]
      %v257 = vld [vmem:[%s1 + $0x14] sm:$0xf]
      %v258 = vld [vmem:[%s1 + $0x18] sm:$0xf]
      %v259 = vld [vmem:[%s1 + $0x1c] sm:$0xf]
      %v260 = vld [vmem:[%s1 + $0x20] sm:$0xf]
      %v261 = vld [vmem:[%s1 + $0x24] sm:$0xf]
      %v262 = vld [vmem:[%s1 + $0x28] sm:$0xf]
      %v263 = vld [vmem:[%s1 + $0x2c] sm:$0xf]
      %v264 = vld [vmem:[%s1 + $0x30] sm:$0xf]
      %v265 = vld [vmem:[%s1 + $0x34] sm:$0xf]
      %v266 = vld [vmem:[%s1 + $0x38] sm:$0xf]
      %v267 = vld [vmem:[%s1 + $0x3c] sm:$0xf]
      %v268 = vld [vmem:[%s1 + $0x40] sm:$0xf]
      %v269 = vld [vmem:[%s1 + $0x44] sm:$0xf]
      %v270 = vld [vmem:[%s1 + $0x48] sm:$0xf]
      %v271 = vld [vmem:[%s1 + $0x4c] sm:$0xf]
      %v272 = vld [vmem:[%s1 + $0x50] sm:$0xf]
      %v273 = vld [vmem:[%s1 + $0x54] sm:$0xf]
      %v274 = vld [vmem:[%s1 + $0x58] sm:$0xf]
      %v275 = vld [vmem:[%s1 + $0x5c] sm:$0xf]
      %v276 = vld [vmem:[%s1 + $0x60] sm:$0xf]
      %v277 = vld [vmem:[%s1 + $0x64] sm:$0xf]
      %v278 = vld [vmem:[%s1 + $0x68] sm:$0xf]
      %v279 = vld [vmem:[%s1 + $0x6c] sm:$0xf]
      %v280 = vld [vmem:[%s1 + $0x70] sm:$0xf]
      %v281 = vld [vmem:[%s1 + $0x74] sm:$0xf]
      %v282 = vld [vmem:[%s1 + $0x78] sm:$0xf]
      %v283 = vld [vmem:[%s1 + $0x7c] sm:$0xf]
      %v286 = vunpack.c.l.s4 1983009808
      %v287 = vunpack.c.0.s8 %v286
      %v288 = vlaneseq
      %v289 = vshrl.u32 %v288, 7
      %v290 = vsub.s32 %v287, %v289
      %v291 = vrot.slane %v251, %v290
      %v292 = vcombine.high %v291, %v291
      %v327 = vunpack.c.l.b16 %v252
      %v328 = vunpack.c.l.b16 %v253
      %v329 = vunpack.c.l.b16 %v254
      %v330 = vunpack.c.l.b16 %v255
      %v331 = vunpack.c.l.b16 %v256
      %v332 = vunpack.c.l.b16 %v257
      %v333 = vunpack.c.l.b16 %v258
      %v334 = vunpack.c.l.b16 %v259
      %v335 = vunpack.c.l.b16 %v260
      %v336 = vunpack.c.l.b16 %v261
      %v337 = vunpack.c.l.b16 %v262
      %v338 = vunpack.c.l.b16 %v263
      %v339 = vunpack.c.l.b16 %v264
      %v340 = vunpack.c.l.b16 %v265
      %v341 = vunpack.c.l.b16 %v266
      %v342 = vunpack.c.l.b16 %v267
      %v343 = vunpack.c.l.b16 %v268
      %v344 = vunpack.c.l.b16 %v269
      %v345 = vunpack.c.l.b16 %v270
      %v346 = vunpack.c.l.b16 %v271
      %v347 = vunpack.c.l.b16 %v272
      %v348 = vunpack.c.l.b16 %v273
      %v349 = vunpack.c.l.b16 %v274
      %v350 = vunpack.c.l.b16 %v275
      %v351 = vunpack.c.l.b16 %v276
      %v352 = vunpack.c.l.b16 %v277
      %v353 = vunpack.c.l.b16 %v278
      %v354 = vunpack.c.l.b16 %v279
      %v355 = vunpack.c.l.b16 %v280
      %v356 = vunpack.c.l.b16 %v281
      %v357 = vunpack.c.l.b16 %v282
      %v358 = vunpack.c.l.b16 %v283
      %v359 = vpack.c.b16 %v328, %v327
      %v360 = vpack.c.b16 %v330, %v329
      %v361 = vpack.c.b16 %v332, %v331
      %v362 = vpack.c.b16 %v334, %v333
      %v363 = vpack.c.b16 %v336, %v335
      %v364 = vpack.c.b16 %v338, %v337
      %v365 = vpack.c.b16 %v340, %v339
      %v366 = vpack.c.b16 %v342, %v341
      %v367 = vpack.c.b16 %v344, %v343
      %v368 = vpack.c.b16 %v346, %v345
      %v369 = vpack.c.b16 %v348, %v347
      %v370 = vpack.c.b16 %v350, %v349
      %v371 = vpack.c.b16 %v352, %v351
      %v372 = vpack.c.b16 %v354, %v353
      %v373 = vpack.c.b16 %v356, %v355
      %v374 = vpack.c.b16 %v358, %v357
      %391 = vmatprep.subr.bf16.mxu0 0
      %392 = vmatpush1.bf16.msra.mxu0 %v359
      %393 = vmatprep.subr.bf16.mxu0 0
      %394 = vmatpush1.bf16.msra.mxu0 %v360
      %395 = vmatprep.subr.bf16.mxu0 0
      %396 = vmatpush1.bf16.msra.mxu0 %v361
      %397 = vmatprep.subr.bf16.mxu0 0
      %398 = vmatpush1.bf16.msra.mxu0 %v362
      %399 = vmatprep.subr.bf16.mxu0 0
      %400 = vmatpush1.bf16.msra.mxu0 %v363
      %401 = vmatprep.subr.bf16.mxu0 0
      %402 = vmatpush1.bf16.msra.mxu0 %v364
      %403 = vmatprep.subr.bf16.mxu0 0
      %404 = vmatpush1.bf16.msra.mxu0 %v365
      %405 = vmatprep.subr.bf16.mxu0 0
      %406 = vmatpush1.bf16.msra.mxu0 %v366
      %407 = vmatprep.subr.bf16.mxu0 0
      %408 = vmatpush1.bf16.msra.mxu0 %v367
      %409 = vmatprep.subr.bf16.mxu0 0
      %410 = vmatpush1.bf16.msra.mxu0 %v368
      %411 = vmatprep.subr.bf16.mxu0 0
      %412 = vmatpush1.bf16.msra.mxu0 %v369
      %413 = vmatprep.subr.bf16.mxu0 0
      %414 = vmatpush1.bf16.msra.mxu0 %v370
      %415 = vmatprep.subr.bf16.mxu0 0
      %416 = vmatpush1.bf16.msra.mxu0 %v371
      %417 = vmatprep.subr.bf16.mxu0 0
      %418 = vmatpush1.bf16.msra.mxu0 %v372
      %419 = vmatprep.subr.bf16.mxu0 0
      %420 = vmatpush1.bf16.msra.mxu0 %v373
      %421 = vmatprep.subr.bf16.mxu0 0
      %422 = vmatpush1.bf16.msra.mxu0 %v374
      %423 = vmatprep.mubr.bf16.mxu0 %v292
      %424 = vmatmul.mubr.bf16.gmra.mrb[0].mxu0 %v291
      %v425 = vpop.f32.mrb[0].mxu0
      %v426 = vadd.f32 0.0, %v425
      %v427 = vpop.f32.mrb[0].mxu0
      %v428 = vpop.f32.mrb[0].mxu0
      %v429 = vpop.f32.mrb[0].mxu0
      %430 = vdwg.mxu0
      %v431 = vld [vmem:[%s2] sm:$0x1]
      %v433 = vrot.slane %v426, 7
      %vm435 = vcmask 1040384
      %v436 = vsel %vm435, %v431, %v433
      %v437 = vld [vmem:[%s3] sm:$0x1f]
      %v438 = vadd.f32 %v436, %v437
      %v439 = vld [vmem:[%s4] sm:$0x1]
      %v440 = vld [vmem:[%s5] sm:$0x1]
      %vm441 = vcmask 258048
      %v442 = vsel %vm441, %v438, 0.0
      %443 = vadd.xlane.f32.xlu0 %v442
      %v444 = vpop.xlane.xlu0 %443
      %v445 = vrcp.pop 32.0
      %v446 = vmul.f32 %v444, %v445
      %v447 = vsub.f32 %v438, %v446
      %v448 = vmul.f32 %v447, %v447
      %v449 = vsel %vm441, %v448, 0.0
      %450 = vadd.xlane.f32.xlu0 %v449
      %v451 = vpop.xlane.xlu0 %450
      %v452 = vmul.f32 %v451, %v445
      %v453 = vadd.f32 %v452, 1e-05
      %v454 = vrsqrt.pop %v453
      %v455 = vmul.f32 %v447, %v454
      %v457 = vlaneseq
      %v458 = vshrl.u32 %v457, 7
      %v459 = vsub.s32 0, %v458
      %v460 = vrot.slane %v439, %v459
      %v462 = vmul.f32 %v455, %v460
      %v464 = vlaneseq
      %v465 = vshrl.u32 %v464, 7
      %v466 = vsub.s32 0, %v465
      %v467 = vrot.slane %v440, %v466
      %v469 = vadd.f32 %v462, %v467
      %470 = vst.msk [vmem:[%s249] sm:$0x1f] %vm441, %v469
      %p471 = scmp.lt.s32.totalorder %s17, 1
      %s472 = scalar_select %p471, %s17, 1
      %s473 = smul.addr %s472, 8
      %s474 = scalar_lea.vmem %s6, %s473
      // Predicated region
      $region45: #{_lambda_.4} parent=43 // pred_check
        %p475 = pneg %p166
      $region46: #{_lambda_.4} parent=43 // pred_check_branch
        %477 = sbr.rel (%p475) target = $region48
      $region47: #{_lambda_.4} parent=43 // pred_region
        _
      $region48: #{_lambda_.4} parent=43 // pred_fallthru
        _
    $region44: #{_lambda_.4} parent=5 // pred_fallthru
      _
    %p478 = scmp.le.s32.totalorder 2, %s12
    // Predicated region
    $region49: #{_lambda_.4} parent=5 // pred_check
      %p479 = pneg %p478
    $region50: #{_lambda_.4} parent=5 // pred_check_branch
      %481 = sbr.rel (%p479) target = $region52
    $region51: #{_lambda_.4} parent=5 // pred_region
      %s482 = ssub.s32 %s12, 2
      // Predicated region
      $region53: #{_lambda_.4} parent=51 // pred_check
        %p483 = pneg %p172
      $region54: #{_lambda_.4} parent=51 // pred_check_branch
        %485 = sbr.rel (%p483) target = $region56
      $region55: #{_lambda_.4} parent=51 // pred_region
        %p486 = scmp.lt.s32.totalorder %s18, 1
        %s487 = scalar_select %p486, %s18, 1
        %s488 = smul.addr %s487, 8
        %s489 = scalar_lea.vmem %s6, %s488
      $region56: #{_lambda_.4} parent=51 // pred_fallthru
        _
    $region52: #{_lambda_.4} parent=5 // pred_fallthru
      _
  $region6: #{_lambda_.4} parent=0 // loop_footer
    %s16 = sadd.s32 1, %s12
  $region7: #{_lambda_.4} parent=0 // loop_footer_branch
    %11 = sbr.rel target = $region3
  $region8: #{_lambda_.4} parent=0 // loop_exit
    _

// kernel: _lambda_.5
$region0: #{_lambda_.5}
  #allocation0 [shape = 'u32[]', space=smem, size = 0x4, offset = 0x4, fixed_abs, tag = 'smem constant byte address 0x4 - core index']
  #allocation1 [shape = 'u32[144,128]{1,0:T(1,128)}', space=vmem, size = 0x12000, scoped, tag = 'internal scratch']
  %s0 = inlined_call_operand.vmem [shape: f32[2,5,32], index: 0, kind: input, shape index: {}, may-alias: {0,13}]
  %s1 = inlined_call_operand.vmem [shape: f32[1,32], index: 1, kind: input, shape index: {}, may-alias: {1,7}]
  %s2 = inlined_call_operand.vmem [shape: f32[1,32], index: 2, kind: input, shape index: {}, may-alias: {2,6,8,12}]
  %s3 = inlined_call_operand.vmem [shape: bf16[32,96], index: 3, kind: input, shape index: {}]
  %s4 = inlined_call_operand.vmem [shape: f32[1,96], index: 4, kind: input, shape index: {}]
  %s5 = inlined_call_operand.vmem [shape: bf16[32,32], index: 5, kind: input, shape index: {}]
  %s6 = inlined_call_operand.vmem [shape: f32[1,32], index: 6, kind: input, shape index: {}, may-alias: {2,6,8,12}]
  %s7 = inlined_call_operand.vmem [shape: f32[1,32], index: 7, kind: input, shape index: {}, may-alias: {1,7}]
  %s8 = inlined_call_operand.vmem [shape: f32[1,32], index: 8, kind: input, shape index: {}, may-alias: {2,6,8,12}]
  %s9 = inlined_call_operand.vmem [shape: bf16[32,128], index: 9, kind: input, shape index: {}]
  %s10 = inlined_call_operand.vmem [shape: f32[1,128], index: 10, kind: input, shape index: {}]
  %s11 = inlined_call_operand.vmem [shape: bf16[128,32], index: 11, kind: input, shape index: {}]
  %s12 = inlined_call_operand.vmem [shape: f32[1,32], index: 12, kind: input, shape index: {}, may-alias: {2,6,8,12}]
  %s13 = inlined_call_operand.vmem [shape: f32[2,5,32], index: 13, kind: output, shape index: {}, may-alias: {0,13}]
  %s14 = sld [smem:[#allocation0]]
  $region85: #{_lambda_.5} parent=0
    _
  %s16 = ssub.s32 1, %s14
  %s17 = scalar_select 0, %s16, %s14
  loop: start=0, step=1, limit=4
  $region2: #{_lambda_.5} parent=0 // loop_pre_header
    _
  $region3: #{_lambda_.5} parent=0 // loop_header
    %s19 = sphi 0, %s23
    %p20 = scmp.ge.s32.totalorder %s19, 4
    %s29 = sphi 0, %s31
    %s32 = sphi 0, %s29
    %s33 = sphi 0, %s32
    %s49 = sphi 0, %s33
    %s53 = sphi 0, %s53
    %s55 = sphi 0, %s53
    %s56 = sphi 0, %s55
    %s70 = sphi 0, %s56
    %s74 = sphi 0, %s74
    %s76 = sphi 0, %s74
    %s77 = sphi 0, %s76
    %s91 = sphi 0, %s77
    %s95 = sphi 0, %s95
    %s97 = sphi 0, %s95
    %s98 = sphi 0, %s97
    %s112 = sphi 0, %s98
    %s116 = sphi 0, %s116
    %s118 = sphi 0, %s116
    %s119 = sphi 0, %s118
    %s133 = sphi 0, %s119
    %s137 = sphi 0, %s137
    %s139 = sphi 0, %s137
    %s140 = sphi 0, %s139
    %s154 = sphi 0, %s140
    %s158 = sphi 0, %s158
    %s160 = sphi 0, %s158
    %s161 = sphi 0, %s160
    %s175 = sphi 0, %s161
    %s179 = sphi 0, %s179
    %s181 = sphi 0, %s179
    %s182 = sphi 0, %s181
    %s196 = sphi 0, %s182
    %s200 = sphi 0, %s200
    %s202 = sphi 0, %s200
    %s203 = sphi 0, %s202
    %s217 = sphi 0, %s203
    %s221 = sphi 0, %s221
    %s223 = sphi 0, %s221
    %s224 = sphi 0, %s223
    %s238 = sphi 0, %s224
    %s242 = sphi 0, %s242
    %s244 = sphi 0, %s242
    %s245 = sphi 0, %s244
    %s259 = sphi 0, %s245
    %s263 = sphi 0, %s263
    %s265 = sphi 0, %s263
    %s266 = sphi 0, %s265
    %s280 = sphi 0, %s266
    %s284 = sphi 0, %s284
    %s286 = sphi 0, %s284
    %s287 = sphi 0, %s286
    %s301 = sphi 0, %s287
    %s307 = sphi 0, %s309
    %s310 = sphi 0, %s307
    %s311 = sphi 0, %s310
    %s327 = sphi 0, %s311
  $region4: #{_lambda_.5} parent=0 // loop_header_branch
    %22 = sbr.rel (%p20) target = $region8
  $region5: #{_lambda_.5} parent=0 // loop_body
    %s24 = ssub.s32 %s19, 1
    %s25 = ssub.s32 %s19, 2
    %s26 = sadd.s32 %s19, 1
    %s27 = ssub.s32 %s19, %s26
    %p28 = scmp.eq.s32.totalorder %s27, 0
    %s30 = sadd.s32 %s29, 1
    %s31 = scalar_select %p28, %s29, %s30
    %p34 = pneg %p28
    %p35 = scmp.eq.s32.totalorder %s19, 1
    %p36 = por %p34, %p35
    %p37 = scmp.ne.s32.totalorder %s29, %s32
    %p38 = scmp.eq.s32.totalorder %s19, 0
    %p39 = por %p37, %p38
    %p40 = scmp.ne.s32.totalorder %s29, %s32
    %p41 = scmp.eq.s32.totalorder %s24, 1
    %p42 = por %p40, %p41
    %p43 = scmp.ne.s32.totalorder %s32, %s33
    %p44 = scmp.eq.s32.totalorder %s24, 0
    %p45 = por %p43, %p44
    %p46 = scmp.ne.s32.totalorder %s32, %s33
    %p47 = scmp.eq.s32.totalorder %s25, 1
    %p48 = por %p46, %p47
    %p50 = scmp.ne.s32.totalorder %s33, %s49
    %p51 = scmp.eq.s32.totalorder %s25, 0
    %p52 = por %p50, %p51
    %s54 = sadd.s32 %s53, 1
    %p57 = scmp.eq.s32.totalorder %s19, 1
    %p58 = scmp.ne.s32.totalorder %s53, %s55
    %p59 = scmp.eq.s32.totalorder %s19, 0
    %p60 = por %p58, %p59
    %p61 = scmp.ne.s32.totalorder %s53, %s55
    %p62 = scmp.eq.s32.totalorder %s24, 1
    %p63 = por %p61, %p62
    %p64 = scmp.ne.s32.totalorder %s55, %s56
    %p65 = scmp.eq.s32.totalorder %s24, 0
    %p66 = por %p64, %p65
    %p67 = scmp.ne.s32.totalorder %s55, %s56
    %p68 = scmp.eq.s32.totalorder %s25, 1
    %p69 = por %p67, %p68
    %p71 = scmp.ne.s32.totalorder %s56, %s70
    %p72 = scmp.eq.s32.totalorder %s25, 0
    %p73 = por %p71, %p72
    %s75 = sadd.s32 %s74, 1
    %p78 = scmp.eq.s32.totalorder %s19, 1
    %p79 = scmp.ne.s32.totalorder %s74, %s76
    %p80 = scmp.eq.s32.totalorder %s19, 0
    %p81 = por %p79, %p80
    %p82 = scmp.ne.s32.totalorder %s74, %s76
    %p83 = scmp.eq.s32.totalorder %s24, 1
    %p84 = por %p82, %p83
    %p85 = scmp.ne.s32.totalorder %s76, %s77
    %p86 = scmp.eq.s32.totalorder %s24, 0
    %p87 = por %p85, %p86
    %p88 = scmp.ne.s32.totalorder %s76, %s77
    %p89 = scmp.eq.s32.totalorder %s25, 1
    %p90 = por %p88, %p89
    %p92 = scmp.ne.s32.totalorder %s77, %s91
    %p93 = scmp.eq.s32.totalorder %s25, 0
    %p94 = por %p92, %p93
    %s96 = sadd.s32 %s95, 1
    %p99 = scmp.eq.s32.totalorder %s19, 1
    %p100 = scmp.ne.s32.totalorder %s95, %s97
    %p101 = scmp.eq.s32.totalorder %s19, 0
    %p102 = por %p100, %p101
    %p103 = scmp.ne.s32.totalorder %s95, %s97
    %p104 = scmp.eq.s32.totalorder %s24, 1
    %p105 = por %p103, %p104
    %p106 = scmp.ne.s32.totalorder %s97, %s98
    %p107 = scmp.eq.s32.totalorder %s24, 0
    %p108 = por %p106, %p107
    %p109 = scmp.ne.s32.totalorder %s97, %s98
    %p110 = scmp.eq.s32.totalorder %s25, 1
    %p111 = por %p109, %p110
    %p113 = scmp.ne.s32.totalorder %s98, %s112
    %p114 = scmp.eq.s32.totalorder %s25, 0
    %p115 = por %p113, %p114
    %s117 = sadd.s32 %s116, 1
    %p120 = scmp.eq.s32.totalorder %s19, 1
    %p121 = scmp.ne.s32.totalorder %s116, %s118
    %p122 = scmp.eq.s32.totalorder %s19, 0
    %p123 = por %p121, %p122
    %p124 = scmp.ne.s32.totalorder %s116, %s118
    %p125 = scmp.eq.s32.totalorder %s24, 1
    %p126 = por %p124, %p125
    %p127 = scmp.ne.s32.totalorder %s118, %s119
    %p128 = scmp.eq.s32.totalorder %s24, 0
    %p129 = por %p127, %p128
    %p130 = scmp.ne.s32.totalorder %s118, %s119
    %p131 = scmp.eq.s32.totalorder %s25, 1
    %p132 = por %p130, %p131
    %p134 = scmp.ne.s32.totalorder %s119, %s133
    %p135 = scmp.eq.s32.totalorder %s25, 0
    %p136 = por %p134, %p135
    %s138 = sadd.s32 %s137, 1
    %p141 = scmp.eq.s32.totalorder %s19, 1
    %p142 = scmp.ne.s32.totalorder %s137, %s139
    %p143 = scmp.eq.s32.totalorder %s19, 0
    %p144 = por %p142, %p143
    %p145 = scmp.ne.s32.totalorder %s137, %s139
    %p146 = scmp.eq.s32.totalorder %s24, 1
    %p147 = por %p145, %p146
    %p148 = scmp.ne.s32.totalorder %s139, %s140
    %p149 = scmp.eq.s32.totalorder %s24, 0
    %p150 = por %p148, %p149
    %p151 = scmp.ne.s32.totalorder %s139, %s140
    %p152 = scmp.eq.s32.totalorder %s25, 1
    %p153 = por %p151, %p152
    %p155 = scmp.ne.s32.totalorder %s140, %s154
    %p156 = scmp.eq.s32.totalorder %s25, 0
    %p157 = por %p155, %p156
    %s159 = sadd.s32 %s158, 1
    %p162 = scmp.eq.s32.totalorder %s19, 1
    %p163 = scmp.ne.s32.totalorder %s158, %s160
    %p164 = scmp.eq.s32.totalorder %s19, 0
    %p165 = por %p163, %p164
    %p166 = scmp.ne.s32.totalorder %s158, %s160
    %p167 = scmp.eq.s32.totalorder %s24, 1
    %p168 = por %p166, %p167
    %p169 = scmp.ne.s32.totalorder %s160, %s161
    %p170 = scmp.eq.s32.totalorder %s24, 0
    %p171 = por %p169, %p170
    %p172 = scmp.ne.s32.totalorder %s160, %s161
    %p173 = scmp.eq.s32.totalorder %s25, 1
    %p174 = por %p172, %p173
    %p176 = scmp.ne.s32.totalorder %s161, %s175
    %p177 = scmp.eq.s32.totalorder %s25, 0
    %p178 = por %p176, %p177
    %s180 = sadd.s32 %s179, 1
    %p183 = scmp.eq.s32.totalorder %s19, 1
    %p184 = scmp.ne.s32.totalorder %s179, %s181
    %p185 = scmp.eq.s32.totalorder %s19, 0
    %p186 = por %p184, %p185
    %p187 = scmp.ne.s32.totalorder %s179, %s181
    %p188 = scmp.eq.s32.totalorder %s24, 1
    %p189 = por %p187, %p188
    %p190 = scmp.ne.s32.totalorder %s181, %s182
    %p191 = scmp.eq.s32.totalorder %s24, 0
    %p192 = por %p190, %p191
    %p193 = scmp.ne.s32.totalorder %s181, %s182
    %p194 = scmp.eq.s32.totalorder %s25, 1
    %p195 = por %p193, %p194
    %p197 = scmp.ne.s32.totalorder %s182, %s196
    %p198 = scmp.eq.s32.totalorder %s25, 0
    %p199 = por %p197, %p198
    %s201 = sadd.s32 %s200, 1
    %p204 = scmp.eq.s32.totalorder %s19, 1
    %p205 = scmp.ne.s32.totalorder %s200, %s202
    %p206 = scmp.eq.s32.totalorder %s19, 0
    %p207 = por %p205, %p206
    %p208 = scmp.ne.s32.totalorder %s200, %s202
    %p209 = scmp.eq.s32.totalorder %s24, 1
    %p210 = por %p208, %p209
    %p211 = scmp.ne.s32.totalorder %s202, %s203
    %p212 = scmp.eq.s32.totalorder %s24, 0
    %p213 = por %p211, %p212
    %p214 = scmp.ne.s32.totalorder %s202, %s203
    %p215 = scmp.eq.s32.totalorder %s25, 1
    %p216 = por %p214, %p215
    %p218 = scmp.ne.s32.totalorder %s203, %s217
    %p219 = scmp.eq.s32.totalorder %s25, 0
    %p220 = por %p218, %p219
    %s222 = sadd.s32 %s221, 1
    %p225 = scmp.eq.s32.totalorder %s19, 1
    %p226 = scmp.ne.s32.totalorder %s221, %s223
    %p227 = scmp.eq.s32.totalorder %s19, 0
    %p228 = por %p226, %p227
    %p229 = scmp.ne.s32.totalorder %s221, %s223
    %p230 = scmp.eq.s32.totalorder %s24, 1
    %p231 = por %p229, %p230
    %p232 = scmp.ne.s32.totalorder %s223, %s224
    %p233 = scmp.eq.s32.totalorder %s24, 0
    %p234 = por %p232, %p233
    %p235 = scmp.ne.s32.totalorder %s223, %s224
    %p236 = scmp.eq.s32.totalorder %s25, 1
    %p237 = por %p235, %p236
    %p239 = scmp.ne.s32.totalorder %s224, %s238
    %p240 = scmp.eq.s32.totalorder %s25, 0
    %p241 = por %p239, %p240
    %s243 = sadd.s32 %s242, 1
    %p246 = scmp.eq.s32.totalorder %s19, 1
    %p247 = scmp.ne.s32.totalorder %s242, %s244
    %p248 = scmp.eq.s32.totalorder %s19, 0
    %p249 = por %p247, %p248
    %p250 = scmp.ne.s32.totalorder %s242, %s244
    %p251 = scmp.eq.s32.totalorder %s24, 1
    %p252 = por %p250, %p251
    %p253 = scmp.ne.s32.totalorder %s244, %s245
    %p254 = scmp.eq.s32.totalorder %s24, 0
    %p255 = por %p253, %p254
    %p256 = scmp.ne.s32.totalorder %s244, %s245
    %p257 = scmp.eq.s32.totalorder %s25, 1
    %p258 = por %p256, %p257
    %p260 = scmp.ne.s32.totalorder %s245, %s259
    %p261 = scmp.eq.s32.totalorder %s25, 0
    %p262 = por %p260, %p261
    %s264 = sadd.s32 %s263, 1
    %p267 = scmp.eq.s32.totalorder %s19, 1
    %p268 = scmp.ne.s32.totalorder %s263, %s265
    %p269 = scmp.eq.s32.totalorder %s19, 0
    %p270 = por %p268, %p269
    %p271 = scmp.ne.s32.totalorder %s263, %s265
    %p272 = scmp.eq.s32.totalorder %s24, 1
    %p273 = por %p271, %p272
    %p274 = scmp.ne.s32.totalorder %s265, %s266
    %p275 = scmp.eq.s32.totalorder %s24, 0
    %p276 = por %p274, %p275
    %p277 = scmp.ne.s32.totalorder %s265, %s266
    %p278 = scmp.eq.s32.totalorder %s25, 1
    %p279 = por %p277, %p278
    %p281 = scmp.ne.s32.totalorder %s266, %s280
    %p282 = scmp.eq.s32.totalorder %s25, 0
    %p283 = por %p281, %p282
    %s285 = sadd.s32 %s284, 1
    %p288 = scmp.eq.s32.totalorder %s19, 1
    %p289 = scmp.ne.s32.totalorder %s284, %s286
    %p290 = scmp.eq.s32.totalorder %s19, 0
    %p291 = por %p289, %p290
    %p292 = scmp.ne.s32.totalorder %s284, %s286
    %p293 = scmp.eq.s32.totalorder %s24, 1
    %p294 = por %p292, %p293
    %p295 = scmp.ne.s32.totalorder %s286, %s287
    %p296 = scmp.eq.s32.totalorder %s24, 0
    %p297 = por %p295, %p296
    %p298 = scmp.ne.s32.totalorder %s286, %s287
    %p299 = scmp.eq.s32.totalorder %s25, 1
    %p300 = por %p298, %p299
    %p302 = scmp.ne.s32.totalorder %s287, %s301
    %p303 = scmp.eq.s32.totalorder %s25, 0
    %p304 = por %p302, %p303
    %s305 = ssub.s32 %s19, %s26
    %p306 = scmp.eq.s32.totalorder %s305, 0
    %s308 = sadd.s32 %s307, 1
    %s309 = scalar_select %p306, %s307, %s308
    %p312 = pneg %p306
    %p313 = scmp.eq.s32.totalorder %s19, 1
    %p314 = por %p312, %p313
    %p315 = scmp.ne.s32.totalorder %s307, %s310
    %p316 = scmp.eq.s32.totalorder %s19, 0
    %p317 = por %p315, %p316
    %p318 = scmp.ne.s32.totalorder %s307, %s310
    %p319 = scmp.eq.s32.totalorder %s24, 1
    %p320 = por %p318, %p319
    %p321 = scmp.ne.s32.totalorder %s310, %s311
    %p322 = scmp.eq.s32.totalorder %s24, 0
    %p323 = por %p321, %p322
    %p324 = scmp.ne.s32.totalorder %s310, %s311
    %p325 = scmp.eq.s32.totalorder %s25, 1
    %p326 = por %p324, %p325
    %p328 = scmp.ne.s32.totalorder %s311, %s327
    %p329 = scmp.eq.s32.totalorder %s25, 0
    %p330 = por %p328, %p329
    %p331 = scmp.le.s32.totalorder 1, %s19
    %p332 = scmp.lt.s32.totalorder %s19, 3
    %p333 = pnand %p331, %p332
    %p334 = pneg %p333
    // Predicated region
    $region9: #{_lambda_.5} parent=5 // pred_check
      _
    $region10: #{_lambda_.5} parent=5 // pred_check_branch
      %336 = sbr.rel (%p333) target = $region12
    $region11: #{_lambda_.5} parent=5 // pred_region
      %s337 = ssub.s32 %s19, 1
      // Predicated region
      $region13: #{_lambda_.5} parent=11 // pred_check
        %p338 = pneg %p66
      $region14: #{_lambda_.5} parent=11 // pred_check_branch
        %340 = sbr.rel (%p338) target = $region16
      $region15: #{_lambda_.5} parent=11 // pred_region
        _
      $region16: #{_lambda_.5} parent=11 // pred_fallthru
        _
      // Predicated region
      $region17: #{_lambda_.5} parent=11 // pred_check
        %p341 = pneg %p87
      $region18: #{_lambda_.5} parent=11 // pred_check_branch
        %343 = sbr.rel (%p341) target = $region20
      $region19: #{_lambda_.5} parent=11 // pred_region
        _
      $region20: #{_lambda_.5} parent=11 // pred_fallthru
        _
      // Predicated region
      $region21: #{_lambda_.5} parent=11 // pred_check
        %p344 = pneg %p108
      $region22: #{_lambda_.5} parent=11 // pred_check_branch
        %346 = sbr.rel (%p344) target = $region24
      $region23: #{_lambda_.5} parent=11 // pred_region
        _
      $region24: #{_lambda_.5} parent=11 // pred_fallthru
        _
      // Predicated region
      $region25: #{_lambda_.5} parent=11 // pred_check
        %p347 = pneg %p129
      $region26: #{_lambda_.5} parent=11 // pred_check_branch
        %349 = sbr.rel (%p347) target = $region28
      $region27: #{_lambda_.5} parent=11 // pred_region
        _
      $region28: #{_lambda_.5} parent=11 // pred_fallthru
        _
      // Predicated region
      $region29: #{_lambda_.5} parent=11 // pred_check
        %p350 = pneg %p150
      $region30: #{_lambda_.5} parent=11 // pred_check_branch
        %352 = sbr.rel (%p350) target = $region32
      $region31: #{_lambda_.5} parent=11 // pred_region
        _
      $region32: #{_lambda_.5} parent=11 // pred_fallthru
        _
      // Predicated region
      $region33: #{_lambda_.5} parent=11 // pred_check
        %p353 = pneg %p171
      $region34: #{_lambda_.5} parent=11 // pred_check_branch
        %355 = sbr.rel (%p353) target = $region36
      $region35: #{_lambda_.5} parent=11 // pred_region
        _
      $region36: #{_lambda_.5} parent=11 // pred_fallthru
        _
      // Predicated region
      $region37: #{_lambda_.5} parent=11 // pred_check
        %p356 = pneg %p192
      $region38: #{_lambda_.5} parent=11 // pred_check_branch
        %358 = sbr.rel (%p356) target = $region40
      $region39: #{_lambda_.5} parent=11 // pred_region
        _
      $region40: #{_lambda_.5} parent=11 // pred_fallthru
        _
      // Predicated region
      $region41: #{_lambda_.5} parent=11 // pred_check
        %p359 = pneg %p213
      $region42: #{_lambda_.5} parent=11 // pred_check_branch
        %361 = sbr.rel (%p359) target = $region44
      $region43: #{_lambda_.5} parent=11 // pred_region
        _
      $region44: #{_lambda_.5} parent=11 // pred_fallthru
        _
      // Predicated region
      $region45: #{_lambda_.5} parent=11 // pred_check
        %p362 = pneg %p234
      $region46: #{_lambda_.5} parent=11 // pred_check_branch
        %364 = sbr.rel (%p362) target = $region48
      $region47: #{_lambda_.5} parent=11 // pred_region
        _
      $region48: #{_lambda_.5} parent=11 // pred_fallthru
        _
      // Predicated region
      $region49: #{_lambda_.5} parent=11 // pred_check
        %p365 = pneg %p255
      $region50: #{_lambda_.5} parent=11 // pred_check_branch
        %367 = sbr.rel (%p365) target = $region52
      $region51: #{_lambda_.5} parent=11 // pred_region
        _
      $region52: #{_lambda_.5} parent=11 // pred_fallthru
        _
      // Predicated region
      $region53: #{_lambda_.5} parent=11 // pred_check
        %p368 = pneg %p276
      $region54: #{_lambda_.5} parent=11 // pred_check_branch
        %370 = sbr.rel (%p368) target = $region56
      $region55: #{_lambda_.5} parent=11 // pred_region
        _
      $region56: #{_lambda_.5} parent=11 // pred_fallthru
        _
      // Predicated region
      $region57: #{_lambda_.5} parent=11 // pred_check
        %p371 = pneg %p297
      $region58: #{_lambda_.5} parent=11 // pred_check_branch
        %373 = sbr.rel (%p371) target = $region60
      $region59: #{_lambda_.5} parent=11 // pred_region
        _
      $region60: #{_lambda_.5} parent=11 // pred_fallthru
        _
    $region12: #{_lambda_.5} parent=5 // pred_fallthru
      _
    %p374 = scmp.lt.s32.totalorder %s19, 2
    // Predicated region
    $region61: #{_lambda_.5} parent=5 // pred_check
      %p375 = pneg %p374
    $region62: #{_lambda_.5} parent=5 // pred_check_branch
      %377 = sbr.rel (%p375) target = $region64
    $region63: #{_lambda_.5} parent=5 // pred_region
      // Predicated region
      $region65: #{_lambda_.5} parent=63 // pred_check
        %p378 = pneg %p39
      $region66: #{_lambda_.5} parent=63 // pred_check_branch
        %380 = sbr.rel (%p378) target = $region68
      $region67: #{_lambda_.5} parent=63 // pred_region
        %p381 = scmp.lt.s32.totalorder %s19, 1
        %s382 = scalar_select %p381, %s19, 1
        %s383 = smul.addr %s382, 8
        %s384 = scalar_lea.vmem %s0, %s383
      $region68: #{_lambda_.5} parent=63 // pred_fallthru
        _
    $region64: #{_lambda_.5} parent=5 // pred_fallthru
      _
    %p385 = scmp.le.s32.totalorder 1, %s19
    %p386 = scmp.lt.s32.totalorder %s19, 3
    %p387 = pnand %p385, %p386
    %p388 = pneg %p387
    // Predicated region
    $region69: #{_lambda_.5} parent=5 // pred_check
      _
    $region70: #{_lambda_.5} parent=5 // pred_check_branch
      %390 = sbr.rel (%p387) target = $region72
    $region71: #{_lambda_.5} parent=5 // pred_region
      %s391 = ssub.s32 %s19, 1
      %p392 = scmp.lt.s32.totalorder %s24, 1
      %s393 = scalar_select %p392, %s24, 1
      %s394 = smul.addr %s393, 8
      %s395 = scalar_lea.vmem %s0, %s394
      %p396 = pneg %p45
      %p397 = pneg %p42
      %p398 = pneg %p66
      %p399 = pneg %p63
      %p400 = pneg %p87
      %p401 = pneg %p84
      %p402 = pneg %p108
      %p403 = pneg %p105
      %p404 = pneg %p129
      %p405 = pneg %p126
      %p406 = pneg %p150
      %p407 = pneg %p147
      %p408 = pneg %p171
      %p409 = pneg %p168
      %p410 = pneg %p192
      %p411 = pneg %p189
      %p412 = pneg %p213
      %p413 = pneg %p210
      %p414 = pneg %p234
      %p415 = pneg %p231
      %p416 = pneg %p255
      %p417 = pneg %p252
      %p418 = pneg %p276
      %p419 = pneg %p273
      %p420 = pneg %p297
      %p421 = pneg %p294
      %p422 = pneg %p323
      %p423 = pneg %p320
      %p424 = scmp.lt.s32.totalorder %s24, 1
      %s425 = scalar_select %p424, %s24, 1
      %s426 = smul.addr %s425, 8
      %s427 = scalar_lea.vmem %s13, %s426
      %p428 = scmp.lt.s32.totalorder %s24, 1
      %s429 = scalar_select %p428, %s24, 1
      %s430 = smul.addr %s429, 8
      %s431 = scalar_lea.vmem %s0, %s430
      %p432 = scmp.lt.s32.totalorder %s24, 1
      %s433 = scalar_select %p432, %s24, 1
      %s434 = smul.addr %s433, 8
      %s435 = scalar_lea.vmem %s13, %s434
      %v437 = vld [vmem:[%s431] sm:$0x1f]
      %v438 = vld [vmem:[%s1] sm:$0x1]
      %v439 = vld [vmem:[%s2] sm:$0x1]
      %vm440 = vcmask 258048
      %v441 = vsel %vm440, %v437, 0.0
      %442 = vadd.xlane.f32.xlu0 %v441
      %v443 = vpop.xlane.xlu0 %442
      %v444 = vrcp.pop 32.0
      %v445 = vmul.f32 %v443, %v444
      %v446 = vsub.f32 %v437, %v445
      %v447 = vmul.f32 %v446, %v446
      %v448 = vsel %vm440, %v447, 0.0
      %449 = vadd.xlane.f32.xlu0 %v448
      %v450 = vpop.xlane.xlu0 %449
      %v451 = vmul.f32 %v450, %v444
      %v452 = vadd.f32 %v451, 1e-05
      %v453 = vrsqrt.pop %v452
      %v454 = vmul.f32 %v446, %v453
      %v456 = vlaneseq
      %v457 = vshrl.u32 %v456, 7
      %v458 = vsub.s32 0, %v457
      %v459 = vrot.slane %v438, %v458
      %v461 = vmul.f32 %v454, %v459
      %v463 = vlaneseq
      %v464 = vshrl.u32 %v463, 7
      %v465 = vsub.s32 0, %v464
      %v466 = vrot.slane %v439, %v465
      %v468 = vadd.f32 %v461, %v466
      %v469 = vpack.c.bf16 %v468, %v468
      %v470 = vld [vmem:[%s3] sm:$0xf]
      %v471 = vld [vmem:[%s3 + $0x4] sm:$0xf]
      %v472 = vld [vmem:[%s3 + $0x8] sm:$0xf]
      %v473 = vld [vmem:[%s3 + $0xc] sm:$0xf]
      %v474 = vld [vmem:[%s4] sm:$0x1]
      %v476 = vlaneseq
      %v477 = vshrl.u32 %v476, 7
      %v478 = vsub.s32 0, %v477
      %v479 = vrot.slane %v474, %v478
      %v485 = vunpack.c.l.b16 %v470
      %v486 = vunpack.c.l.b16 %v471
      %v487 = vunpack.c.l.b16 %v472
      %v488 = vunpack.c.l.b16 %v473
      %v489 = vpack.c.b16 %v486, %v485
      %v490 = vpack.c.b16 %v488, %v487
      %vm493 = vcmask 261120
      %v495 = vsel %vm493, %v469, 0
      %497 = vmatprep.subr.bf16.mxu0 0
      %498 = vmatpush1.bf16.msra.mxu0 %v489
      %499 = vmatprep.subr.bf16.mxu0 0
      %500 = vmatpush1.bf16.msra.mxu0 %v490
      %501 = vmatprep.subr.bf16.mxu0 0
      %502 = vmatpush1.bf16.msra.mxu0 0
      %503 = vmatprep.subr.bf16.mxu0 0
      %504 = vmatpush1.bf16.msra.mxu0 0
      %505 = vmatprep.subr.bf16.mxu0 0
      %506 = vmatpush1.bf16.msra.mxu0 0
      %507 = vmatprep.subr.bf16.mxu0 0
      %508 = vmatpush1.bf16.msra.mxu0 0
      %509 = vmatprep.subr.bf16.mxu0 0
      %510 = vmatpush1.bf16.msra.mxu0 0
      %511 = vmatprep.subr.bf16.mxu0 0
      %512 = vmatpush1.bf16.msra.mxu0 0
      %513 = vmatprep.subr.bf16.mxu0 0
      %514 = vmatpush1.bf16.msra.mxu0 0
      %515 = vmatprep.subr.bf16.mxu0 0
      %516 = vmatpush1.bf16.msra.mxu0 0
      %517 = vmatprep.subr.bf16.mxu0 0
      %518 = vmatpush1.bf16.msra.mxu0 0
      %519 = vmatprep.subr.bf16.mxu0 0
      %520 = vmatpush1.bf16.msra.mxu0 0
      %521 = vmatprep.subr.bf16.mxu0 0
      %522 = vmatpush1.bf16.msra.mxu0 0
      %523 = vmatprep.subr.bf16.mxu0 0
      %524 = vmatpush1.bf16.msra.mxu0 0
      %525 = vmatprep.subr.bf16.mxu0 0
      %526 = vmatpush1.bf16.msra.mxu0 0
      %527 = vmatprep.subr.bf16.mxu0 0
      %528 = vmatpush1.bf16.msra.mxu0 0
      %529 = vmatprep.mubr.bf16.mxu0 0
      %530 = vmatmul.mubr.bf16.gmra.mrb[0].mxu0 %v495
      %v531 = vpop.f32.mrb[0].mxu0
      %v532 = vadd.f32 %v479, %v531
      %v533 = vpop.f32.mrb[0].mxu0
      %v534 = vpop.f32.mrb[0].mxu0
      %v535 = vpop.f32.mrb[0].mxu0
      %536 = vdwg.mxu0
      %v537 = vpack.c.bf16 %v532, %v532
      %539 = vrot.lane.b32.xlu0 %v537, 96
      %v540 = vpop.permute.xlu0 %539
      %vm541 = vcmask 64512
      %v543 = vsel %vm541, %v537, 0
      %v546 = vsel %vm541, %v540, 0
      %548 = vmatprep.subr.bf16.mxu0 0
      %549 = vmatpush1.bf16.xpose.msra.mxu0 %v546
      %550 = vmatprep.subr.bf16.mxu0 0
      %551 = vmatpush1.bf16.xpose.msra.mxu0 0
      %552 = vmatprep.subr.bf16.mxu0 0
      %553 = vmatpush1.bf16.xpose.msra.mxu0 0
      %554 = vmatprep.subr.bf16.mxu0 0
      %555 = vmatpush1.bf16.xpose.msra.mxu0 0
      %556 = vmatprep.subr.bf16.mxu0 0
      %557 = vmatpush1.bf16.xpose.msra.mxu0 0
      %558 = vmatprep.subr.bf16.mxu0 0
      %559 = vmatpush1.bf16.xpose.msra.mxu0 0
      %560 = vmatprep.subr.bf16.mxu0 0
      %561 = vmatpush1.bf16.xpose.msra.mxu0 0
      %562 = vmatprep.subr.bf16.mxu0 0
      %563 = vmatpush1.bf16.xpose.msra.mxu0 0
      %564 = vmatprep.subr.bf16.mxu0 0
      %565 = vmatpush1.bf16.xpose.msra.mxu0 0
      %566 = vmatprep.subr.bf16.mxu0 0
      %567 = vmatpush1.bf16.xpose.msra.mxu0 0
      %568 = vmatprep.subr.bf16.mxu0 0
      %569 = vmatpush1.bf16.xpose.msra.mxu0 0
      %570 = vmatprep.subr.bf16.mxu0 0
      %571 = vmatpush1.bf16.xpose.msra.mxu0 0
      %572 = vmatprep.subr.bf16.mxu0 0
      %573 = vmatpush1.bf16.xpose.msra.mxu0 0
      %574 = vmatprep.subr.bf16.mxu0 0
      %575 = vmatpush1.bf16.xpose.msra.mxu0 0
      %576 = vmatprep.subr.bf16.mxu0 0
      %577 = vmatpush1.bf16.xpose.msra.mxu0 0
      %578 = vmatprep.subr.bf16.mxu0 0
      %579 = vmatpush1.bf16.xpose.msra.mxu0 0
      %580 = vmatprep.mubr.bf16.mxu0 0
      %581 = vmatmul.mubr.bf16.gmra.mrb[0].mxu0 %v543
      %v582 = vpop.f32.mrb[0].mxu0
      %v583 = vadd.f32 0.0, %v582
      %v584 = vpop.f32.mrb[0].mxu0
      %v585 = vpop.f32.mrb[0].mxu0
      %v586 = vpop.f32.mrb[0].mxu0
      %587 = vdwg.mxu0
      %vm588 = vcmask 36864
      %v589 = vsel %vm588, %v583, -inf
      %590 = vmax.xlane.f32.xlu0 %v589
      %v591 = vpop.xlane.xlu0 %590
      %v592 = vsub.f32 %v583, %v591
      %v593 = vmul.f32 %v592, 1.442695
      %v594 = vpow.pop %v593
      %v595 = vsel %vm588, %v594, 0.0
      %596 = vadd.xlane.f32.xlu0 %v595
      %v597 = vpop.xlane.xlu0 %596
      %v598 = vrcp.pop %v597
      %v599 = vmul.f32 %v594, %v598
      %v600 = vpack.c.bf16 %v599, %v599
      %601 = vrot.lane.b32.xlu0 %v537, 64
      %v602 = vpop.permute.xlu0 %601
      %vm603 = vcmask 39936
      %v605 = vsel %vm603, %v600, 0
      %vm607 = vcmask 1041408
      %vm608 = vcmask 1042432
      %v609 = vsel %vm607, 4294967295, 65535
      %v610 = vsel %vm608, %v609, 0
      %v612 = vand.u32 %v602, %v610
      %614 = vmatprep.subr.bf16.mxu0 0
      %615 = vmatpush1.bf16.msra.mxu0 %v612
      %616 = vmatprep.subr.bf16.mxu0 0
      %617 = vmatpush1.bf16.msra.mxu0 0
      %618 = vmatprep.subr.bf16.mxu0 0
      %619 = vmatpush1.bf16.msra.mxu0 0
      %620 = vmatprep.subr.bf16.mxu0 0
      %621 = vmatpush1.bf16.msra.mxu0 0
      %622 = vmatprep.subr.bf16.mxu0 0
      %623 = vmatpush1.bf16.msra.mxu0 0
      %624 = vmatprep.subr.bf16.mxu0 0
      %625 = vmatpush1.bf16.msra.mxu0 0
      %626 = vmatprep.subr.bf16.mxu0 0
      %627 = vmatpush1.bf16.msra.mxu0 0
      %628 = vmatprep.subr.bf16.mxu0 0
      %629 = vmatpush1.bf16.msra.mxu0 0
      %630 = vmatprep.subr.bf16.mxu0 0
      %631 = vmatpush1.bf16.msra.mxu0 0
      %632 = vmatprep.subr.bf16.mxu0 0
      %633 = vmatpush1.bf16.msra.mxu0 0
      %634 = vmatprep.subr.bf16.mxu0 0
      %635 = vmatpush1.bf16.msra.mxu0 0
      %636 = vmatprep.subr.bf16.mxu0 0
      %637 = vmatpush1.bf16.msra.mxu0 0
      %638 = vmatprep.subr.bf16.mxu0 0
      %639 = vmatpush1.bf16.msra.mxu0 0
      %640 = vmatprep.subr.bf16.mxu0 0
      %641 = vmatpush1.bf16.msra.mxu0 0
      %642 = vmatprep.subr.bf16.mxu0 0
      %643 = vmatpush1.bf16.msra.mxu0 0
      %644 = vmatprep.subr.bf16.mxu0 0
      %645 = vmatpush1.bf16.msra.mxu0 0
      %646 = vmatprep.mubr.bf16.mxu0 0
      %647 = vmatmul.mubr.bf16.gmra.mrb[0].mxu0 %v605
      %v648 = vpop.f32.mrb[0].mxu0
      %v649 = vadd.f32 0.0, %v648
      %v650 = vpop.f32.mrb[0].mxu0
      %v651 = vpop.f32.mrb[0].mxu0
      %v652 = vpop.f32.mrb[0].mxu0
      %653 = vdwg.mxu0
      %654 = vrot.lane.b32.xlu0 %v537, 120
      %v655 = vpop.permute.xlu0 %654
      %656 = vrot.lane.b32.xlu0 %v537, 88
      %v657 = vpop.permute.xlu0 %656
      %v659 = vsel %vm541, %v655, 0
      %v662 = vsel %vm541, %v657, 0
      %664 = vmatprep.subr.bf16.mxu0 0
      %665 = vmatpush1.bf16.xpose.msra.mxu0 %v662
      %666 = vmatprep.subr.bf16.mxu0 0
      %667 = vmatpush1.bf16.xpose.msra.mxu0 0
      %668 = vmatprep.subr.bf16.mxu0 0
      %669 = vmatpush1.bf16.xpose.msra.mxu0 0
      %670 = vmatprep.subr.bf16.mxu0 0
      %671 = vmatpush1.bf16.xpose.msra.mxu0 0
      %672 = vmatprep.subr.bf16.mxu0 0
      %673 = vmatpush1.bf16.xpose.msra.mxu0 0
      %674 = vmatprep.subr.bf16.mxu0 0
      %675 = vmatpush1.bf16.xpose.msra.mxu0 0
      %676 = vmatprep.subr.bf16.mxu0 0
      %677 = vmatpush1.bf16.xpose.msra.mxu0 0
      %678 = vmatprep.subr.bf16.mxu0 0
      %679 = vmatpush1.bf16.xpose.msra.mxu0 0
      %680 = vmatprep.subr.bf16.mxu0 0
      %681 = vmatpush1.bf16.xpose.msra.mxu0 0
      %682 = vmatprep.subr.bf16.mxu0 0
      %683 = vmatpush1.bf16.xpose.msra.mxu0 0
      %684 = vmatprep.subr.bf16.mxu0 0
      %685 = vmatpush1.bf16.xpose.msra.mxu0 0
      %686 = vmatprep.subr.bf16.mxu0 0
      %687 = vmatpush1.bf16.xpose.msra.mxu0 0
      %688 = vmatprep.subr.bf16.mxu0 0
      %689 = vmatpush1.bf16.xpose.msra.mxu0 0
      %690 = vmatprep.subr.bf16.mxu0 0
      %691 = vmatpush1.bf16.xpose.msra.mxu0 0
      %692 = vmatprep.subr.bf16.mxu0 0
      %693 = vmatpush1.bf16.xpose.msra.mxu0 0
      %694 = vmatprep.subr.bf16.mxu0 0
      %695 = vmatpush1.bf16.xpose.msra.mxu0 0
      %696 = vmatprep.mubr.bf16.mxu0 0
      %697 = vmatmul.mubr.bf16.gmra.mrb[0].mxu0 %v659
      %v698 = vpop.f32.mrb[0].mxu0
      %v699 = vadd.f32 0.0, %v698
      %v700 = vpop.f32.mrb[0].mxu0
      %v701 = vpop.f32.mrb[0].mxu0
      %v702 = vpop.f32.mrb[0].mxu0
      %703 = vdwg.mxu0
      %v704 = vsel %vm588, %v699, -inf
      %705 = vmax.xlane.f32.xlu0 %v704
      %v706 = vpop.xlane.xlu0 %705
      %v707 = vsub.f32 %v699, %v706
      %v708 = vmul.f32 %v707, 1.442695
      %v709 = vpow.pop %v708
      %v710 = vsel %vm588, %v709, 0.0
      %711 = vadd.xlane.f32.xlu0 %v710
      %v712 = vpop.xlane.xlu0 %711
      %v713 = vrcp.pop %v712
      %v714 = vmul.f32 %v709, %v713
      %v715 = vpack.c.bf16 %v714, %v714
      %716 = vrot.lane.b32.xlu0 %v537, 56
      %v717 = vpop.permute.xlu0 %716
      %v719 = vsel %vm603, %v715, 0
      %v722 = vand.u32 %v717, %v610
      %724 = vmatprep.subr.bf16.mxu0 0
      %725 = vmatpush1.bf16.msra.mxu0 %v722
      %726 = vmatprep.subr.bf16.mxu0 0
      %727 = vmatpush1.bf16.msra.mxu0 0
      %728 = vmatprep.subr.bf16.mxu0 0
      %729 = vmatpush1.bf16.msra.mxu0 0
      %730 = vmatprep.subr.bf16.mxu0 0
      %731 = vmatpush1.bf16.msra.mxu0 0
      %732 = vmatprep.subr.bf16.mxu0 0
      %733 = vmatpush1.bf16.msra.mxu0 0
      %734 = vmatprep.subr.bf16.mxu0 0
      %735 = vmatpush1.bf16.msra.mxu0 0
      %736 = vmatprep.subr.bf16.mxu0 0
      %737 = vmatpush1.bf16.msra.mxu0 0
      %738 = vmatprep.subr.bf16.mxu0 0
      %739 = vmatpush1.bf16.msra.mxu0 0
      %740 = vmatprep.subr.bf16.mxu0 0
      %741 = vmatpush1.bf16.msra.mxu0 0
      %742 = vmatprep.subr.bf16.mxu0 0
      %743 = vmatpush1.bf16.msra.mxu0 0
      %744 = vmatprep.subr.bf16.mxu0 0
      %745 = vmatpush1.bf16.msra.mxu0 0
      %746 = vmatprep.subr.bf16.mxu0 0
      %747 = vmatpush1.bf16.msra.mxu0 0
      %748 = vmatprep.subr.bf16.mxu0 0
      %749 = vmatpush1.bf16.msra.mxu0 0
      %750 = vmatprep.subr.bf16.mxu0 0
      %751 = vmatpush1.bf16.msra.mxu0 0
      %752 = vmatprep.subr.bf16.mxu0 0
      %753 = vmatpush1.bf16.msra.mxu0 0
      %754 = vmatprep.subr.bf16.mxu0 0
      %755 = vmatpush1.bf16.msra.mxu0 0
      %756 = vmatprep.mubr.bf16.mxu0 0
      %757 = vmatmul.mubr.bf16.gmra.mrb[0].mxu0 %v719
      %v758 = vpop.f32.mrb[0].mxu0
      %v759 = vadd.f32 0.0, %v758
      %v760 = vpop.f32.mrb[0].mxu0
      %v761 = vpop.f32.mrb[0].mxu0
      %v762 = vpop.f32.mrb[0].mxu0
      %763 = vdwg.mxu0
      %764 = vrot.lane.b32.xlu0 %v537, 112
      %v765 = vpop.permute.xlu0 %764
      %766 = vrot.lane.b32.xlu0 %v537, 80
      %v767 = vpop.permute.xlu0 %766
      %v769 = vsel %vm541, %v765, 0
      %v772 = vsel %vm541, %v767, 0
      %774 = vmatprep.subr.bf16.mxu0 0
      %775 = vmatpush1.bf16.xpose.msra.mxu0 %v772
      %776 = vmatprep.subr.bf16.mxu0 0
      %777 = vmatpush1.bf16.xpose.msra.mxu0 0
      %778 = vmatprep.subr.bf16.mxu0 0
      %779 = vmatpush1.bf16.xpose.msra.mxu0 0
      %780 = vmatprep.subr.bf16.mxu0 0
      %781 = vmatpush1.bf16.xpose.msra.mxu0 0
      %782 = vmatprep.subr.bf16.mxu0 0
      %783 = vmatpush1.bf16.xpose.msra.mxu0 0
      %784 = vmatprep.subr.bf16.mxu0 0
      %785 = vmatpush1.bf16.xpose.msra.mxu0 0
      %786 = vmatprep.subr.bf16.mxu0 0
      %787 = vmatpush1.bf16.xpose.msra.mxu0 0
      %788 = vmatprep.subr.bf16.mxu0 0
      %789 = vmatpush1.bf16.xpose.msra.mxu0 0
      %790 = vmatprep.subr.bf16.mxu0 0
      %791 = vmatpush1.bf16.xpose.msra.mxu0 0
      %792 = vmatprep.subr.bf16.mxu0 0
      %793 = vmatpush1.bf16.xpose.msra.mxu0 0
      %794 = vmatprep.subr.bf16.mxu0 0
      %795 = vmatpush1.bf16.xpose.msra.mxu0 0
      %796 = vmatprep.subr.bf16.mxu0 0
      %797 = vmatpush1.bf16.xpose.msra.mxu0 0
      %798 = vmatprep.subr.bf16.mxu0 0
      %799 = vmatpush1.bf16.xpose.msra.mxu0 0
      %800 = vmatprep.subr.bf16.mxu0 0
      %801 = vmatpush1.bf16.xpose.msra.mxu0 0
      %802 = vmatprep.subr.bf16.mxu0 0
      %803 = vmatpush1.bf16.xpose.msra.mxu0 0
      %804 = vmatprep.subr.bf16.mxu0 0
      %805 = vmatpush1.bf16.xpose.msra.mxu0 0
      %806 = vmatprep.mubr.bf16.mxu0 0
      %807 = vmatmul.mubr.bf16.gmra.mrb[0].mxu0 %v769
      %v808 = vpop.f32.mrb[0].mxu0
      %v809 = vadd.f32 0.0, %v808
      %v810 = vpop.f32.mrb[0].mxu0
      %v811 = vpop.f32.mrb[0].mxu0
      %v812 = vpop.f32.mrb[0].mxu0
      %813 = vdwg.mxu0
      %v814 = vsel %vm588, %v809, -inf
      %815 = vmax.xlane.f32.xlu0 %v814
      %v816 = vpop.xlane.xlu0 %815
      %v817 = vsub.f32 %v809, %v816
      %v818 = vmul.f32 %v817, 1.442695
      %v819 = vpow.pop %v818
      %v820 = vsel %vm588, %v819, 0.0
      %821 = vadd.xlane.f32.xlu0 %v820
      %v822 = vpop.xlane.xlu0 %821
      %v823 = vrcp.pop %v822
      %v824 = vmul.f32 %v819, %v823
      %v825 = vpack.c.bf16 %v824, %v824
      %826 = vrot.lane.b32.xlu0 %v537, 48
      %v827 = vpop.permute.xlu0 %826
      %v829 = vsel %vm603, %v825, 0
      %v832 = vand.u32 %v827, %v610
      %834 = vmatprep.subr.bf16.mxu0 0
      %835 = vmatpush1.bf16.msra.mxu0 %v832
      %836 = vmatprep.subr.bf16.mxu0 0
      %837 = vmatpush1.bf16.msra.mxu0 0
      %838 = vmatprep.subr.bf16.mxu0 0
      %839 = vmatpush1.bf16.msra.mxu0 0
      %840 = vmatprep.subr.bf16.mxu0 0
      %841 = vmatpush1.bf16.msra.mxu0 0
      %842 = vmatprep.subr.bf16.mxu0 0
      %843 = vmatpush1.bf16.msra.mxu0 0
      %844 = vmatprep.subr.bf16.mxu0 0
      %845 = vmatpush1.bf16.msra.mxu0 0
      %846 = vmatprep.subr.bf16.mxu0 0
      %847 = vmatpush1.bf16.msra.mxu0 0
      %848 = vmatprep.subr.bf16.mxu0 0
      %849 = vmatpush1.bf16.msra.mxu0 0
      %850 = vmatprep.subr.bf16.mxu0 0
      %851 = vmatpush1.bf16.msra.mxu0 0
      %852 = vmatprep.subr.bf16.mxu0 0
      %853 = vmatpush1.bf16.msra.mxu0 0
      %854 = vmatprep.subr.bf16.mxu0 0
      %855 = vmatpush1.bf16.msra.mxu0 0
      %856 = vmatprep.subr.bf16.mxu0 0
      %857 = vmatpush1.bf16.msra.mxu0 0
      %858 = vmatprep.subr.bf16.mxu0 0
      %859 = vmatpush1.bf16.msra.mxu0 0
      %860 = vmatprep.subr.bf16.mxu0 0
      %861 = vmatpush1.bf16.msra.mxu0 0
      %862 = vmatprep.subr.bf16.mxu0 0
      %863 = vmatpush1.bf16.msra.mxu0 0
      %864 = vmatprep.subr.bf16.mxu0 0
      %865 = vmatpush1.bf16.msra.mxu0 0
      %866 = vmatprep.mubr.bf16.mxu0 0
      %867 = vmatmul.mubr.bf16.gmra.mrb[0].mxu0 %v829
      %v868 = vpop.f32.mrb[0].mxu0
      %v869 = vadd.f32 0.0, %v868
      %v870 = vpop.f32.mrb[0].mxu0
      %v871 = vpop.f32.mrb[0].mxu0
      %v872 = vpop.f32.mrb[0].mxu0
      %873 = vdwg.mxu0
      %874 = vrot.lane.b32.xlu0 %v537, 104
      %v875 = vpop.permute.xlu0 %874
      %876 = vrot.lane.b32.xlu0 %v537, 72
      %v877 = vpop.permute.xlu0 %876
      %v879 = vsel %vm541, %v875, 0
      %v882 = vsel %vm541, %v877, 0
      %884 = vmatprep.subr.bf16.mxu0 0
      %885 = vmatpush1.bf16.xpose.msra.mxu0 %v882
      %886 = vmatprep.subr.bf16.mxu0 0
      %887 = vmatpush1.bf16.xpose.msra.mxu0 0
      %888 = vmatprep.subr.bf16.mxu0 0
      %889 = vmatpush1.bf16.xpose.msra.mxu0 0
      %890 = vmatprep.subr.bf16.mxu0 0
      %891 = vmatpush1.bf16.xpose.msra.mxu0 0
      %892 = vmatprep.subr.bf16.mxu0 0
      %893 = vmatpush1.bf16.xpose.msra.mxu0 0
      %894 = vmatprep.subr.bf16.mxu0 0
      %895 = vmatpush1.bf16.xpose.msra.mxu0 0
      %896 = vmatprep.subr.bf16.mxu0 0
      %897 = vmatpush1.bf16.xpose.msra.mxu0 0
      %898 = vmatprep.subr.bf16.mxu0 0
      %899 = vmatpush1.bf16.xpose.msra.mxu0 0
      %900 = vmatprep.subr.bf16.mxu0 0
      %901 = vmatpush1.bf16.xpose.msra.mxu0 0
      %902 = vmatprep.subr.bf16.mxu0 0
      %903 = vmatpush1.bf16.xpose.msra.mxu0 0
      %904 = vmatprep.subr.bf16.mxu0 0
      %905 = vmatpush1.bf16.xpose.msra.mxu0 0
      %906 = vmatprep.subr.bf16.mxu0 0
      %907 = vmatpush1.bf16.xpose.msra.mxu0 0
      %908 = vmatprep.subr.bf16.mxu0 0
      %909 = vmatpush1.bf16.xpose.msra.mxu0 0
      %910 = vmatprep.subr.bf16.mxu0 0
      %911 = vmatpush1.bf16.xpose.msra.mxu0 0
      %912 = vmatprep.subr.bf16.mxu0 0
      %913 = vmatpush1.bf16.xpose.msra.mxu0 0
      %914 = vmatprep.subr.bf16.mxu0 0
      %915 = vmatpush1.bf16.xpose.msra.mxu0 0
      %916 = vmatprep.mubr.bf16.mxu0 0
      %917 = vmatmul.mubr.bf16.gmra.mrb[0].mxu0 %v879
      %v918 = vpop.f32.mrb[0].mxu0
      %v919 = vadd.f32 0.0, %v918
      %v920 = vpop.f32.mrb[0].mxu0
      %v921 = vpop.f32.mrb[0].mxu0
      %v922 = vpop.f32.mrb[0].mxu0
      %923 = vdwg.mxu0
      %v924 = vsel %vm588, %v919, -inf
      %925 = vmax.xlane.f32.xlu0 %v924
      %v926 = vpop.xlane.xlu0 %925
      %v927 = vsub.f32 %v919, %v926
      %v928 = vmul.f32 %v927, 1.442695
      %v929 = vpow.pop %v928
      %v930 = vsel %vm588, %v929, 0.0
      %931 = vadd.xlane.f32.xlu0 %v930
      %v932 = vpop.xlane.xlu0 %931
      %v933 = vrcp.pop %v932
      %v934 = vmul.f32 %v929, %v933
      %v935 = vpack.c.bf16 %v934, %v934
      %936 = vrot.lane.b32.xlu0 %v537, 40
      %v937 = vpop.permute.xlu0 %936
      %v939 = vsel %vm603, %v935, 0
      %v942 = vand.u32 %v937, %v610
      %944 = vmatprep.subr.bf16.mxu0 0
      %945 = vmatpush1.bf16.msra.mxu0 %v942
      %946 = vmatprep.subr.bf16.mxu0 0
      %947 = vmatpush1.bf16.msra.mxu0 0
      %948 = vmatprep.subr.bf16.mxu0 0
      %949 = vmatpush1.bf16.msra.mxu0 0
      %950 = vmatprep.subr.bf16.mxu0 0
      %951 = vmatpush1.bf16.msra.mxu0 0
      %952 = vmatprep.subr.bf16.mxu0 0
      %953 = vmatpush1.bf16.msra.mxu0 0
      %954 = vmatprep.subr.bf16.mxu0 0
      %955 = vmatpush1.bf16.msra.mxu0 0
      %956 = vmatprep.subr.bf16.mxu0 0
      %957 = vmatpush1.bf16.msra.mxu0 0
      %958 = vmatprep.subr.bf16.mxu0 0
      %959 = vmatpush1.bf16.msra.mxu0 0
      %960 = vmatprep.subr.bf16.mxu0 0
      %961 = vmatpush1.bf16.msra.mxu0 0
      %962 = vmatprep.subr.bf16.mxu0 0
      %963 = vmatpush1.bf16.msra.mxu0 0
      %964 = vmatprep.subr.bf16.mxu0 0
      %965 = vmatpush1.bf16.msra.mxu0 0
      %966 = vmatprep.subr.bf16.mxu0 0
      %967 = vmatpush1.bf16.msra.mxu0 0
      %968 = vmatprep.subr.bf16.mxu0 0
      %969 = vmatpush1.bf16.msra.mxu0 0
      %970 = vmatprep.subr.bf16.mxu0 0
      %971 = vmatpush1.bf16.msra.mxu0 0
      %972 = vmatprep.subr.bf16.mxu0 0
      %973 = vmatpush1.bf16.msra.mxu0 0
      %974 = vmatprep.subr.bf16.mxu0 0
      %975 = vmatpush1.bf16.msra.mxu0 0
      %976 = vmatprep.mubr.bf16.mxu0 0
      %977 = vmatmul.mubr.bf16.gmra.mrb[0].mxu0 %v939
      %v978 = vpop.f32.mrb[0].mxu0
      %v979 = vadd.f32 0.0, %v978
      %v980 = vpop.f32.mrb[0].mxu0
      %v981 = vpop.f32.mrb[0].mxu0
      %v982 = vpop.f32.mrb[0].mxu0
      %983 = vdwg.mxu0
      %985 = vrot.lane.b32.xlu0 %v759, 8
      %v986 = vpop.permute.xlu0 %985
      %989 = vrot.lane.b32.xlu0 %v869, 16
      %v990 = vpop.permute.xlu0 %989
      %993 = vrot.lane.b32.xlu0 %v979, 24
      %v994 = vpop.permute.xlu0 %993
      %v996 = vsel %vm541, %v649, %v986
      %vm997 = vcmask 130048
      %v998 = vsel %vm997, %v996, %v990
      %vm999 = vcmask 195584
      %v1000 = vsel %vm999, %v998, %v994
      %v1001 = vld [vmem:[%s6] sm:$0x1]
      %v1003 = vlaneseq
      %v1004 = vshrl.u32 %v1003, 7
      %v1005 = vsub.s32 0, %v1004
      %v1006 = vrot.slane %v1001, %v1005
      %v1008 = vadd.f32 %v437, %v1006
      %v1009 = vpack.c.bf16 %v1000, %v1000
      %v1010 = vld [vmem:[%s5] sm:$0xf]
      %v1011 = vld [vmem:[%s5 + $0x4] sm:$0xf]
      %v1012 = vld [vmem:[%s5 + $0x8] sm:$0xf]
      %v1013 = vld [vmem:[%s5 + $0xc] sm:$0xf]
      %v1018 = vunpack.c.l.b16 %v1010
      %v1019 = vunpack.c.l.b16 %v1011
      %v1020 = vunpack.c.l.b16 %v1012
      %v1021 = vunpack.c.l.b16 %v1013
      %v1022 = vpack.c.b16 %v1019, %v1018
      %v1023 = vpack.c.b16 %v1021, %v1020
      %v1027 = vsel %vm493, %v1009, 0
      %1029 = vmatprep.subr.bf16.mxu0 0
      %1030 = vmatpush1.bf16.msra.mxu0 %v1022
      %1031 = vmatprep.subr.bf16.mxu0 0
      %1032 = vmatpush1.bf16.msra.mxu0 %v1023
      %1033 = vmatprep.subr.bf16.mxu0 0
      %1034 = vmatpush1.bf16.msra.mxu0 0
      %1035 = vmatprep.subr.bf16.mxu0 0
      %1036 = vmatpush1.bf16.msra.mxu0 0
      %1037 = vmatprep.subr.bf16.mxu0 0
      %1038 = vmatpush1.bf16.msra.mxu0 0
      %1039 = vmatprep.subr.bf16.mxu0 0
      %1040 = vmatpush1.bf16.msra.mxu0 0
      %1041 = vmatprep.subr.bf16.mxu0 0
      %1042 = vmatpush1.bf16.msra.mxu0 0
      %1043 = vmatprep.subr.bf16.mxu0 0
      %1044 = vmatpush1.bf16.msra.mxu0 0
      %1045 = vmatprep.subr.bf16.mxu0 0
      %1046 = vmatpush1.bf16.msra.mxu0 0
      %1047 = vmatprep.subr.bf16.mxu0 0
      %1048 = vmatpush1.bf16.msra.mxu0 0
      %1049 = vmatprep.subr.bf16.mxu0 0
      %1050 = vmatpush1.bf16.msra.mxu0 0
      %1051 = vmatprep.subr.bf16.mxu0 0
      %1052 = vmatpush1.bf16.msra.mxu0 0
      %1053 = vmatprep.subr.bf16.mxu0 0
      %1054 = vmatpush1.bf16.msra.mxu0 0
      %1055 = vmatprep.subr.bf16.mxu0 0
      %1056 = vmatpush1.bf16.msra.mxu0 0
      %1057 = vmatprep.subr.bf16.mxu0 0
      %1058 = vmatpush1.bf16.msra.mxu0 0
      %1059 = vmatprep.subr.bf16.mxu0 0
      %1060 = vmatpush1.bf16.msra.mxu0 0
      %1061 = vmatprep.mubr.bf16.mxu0 0
      %1062 = vmatmul.mubr.bf16.gmra.mrb[0].mxu0 %v1027
      %v1063 = vpop.f32.mrb[0].mxu0
      %v1064 = vadd.f32 0.0, %v1063
      %v1065 = vpop.f32.mrb[0].mxu0
      %v1066 = vpop.f32.mrb[0].mxu0
      %v1067 = vpop.f32.mrb[0].mxu0
      %1068 = vdwg.mxu0
      %v1069 = vadd.f32 %v1008, %v1064
      %v1070 = vld [vmem:[%s7] sm:$0x1]
      %v1071 = vld [vmem:[%s8] sm:$0x1]
      %v1072 = vsel %vm440, %v1069, 0.0
      %1073 = vadd.xlane.f32.xlu0 %v1072
      %v1074 = vpop.xlane.xlu0 %1073
      %v1075 = vmul.f32 %v1074, %v444
      %v1076 = vsub.f32 %v1069, %v1075
      %v1077 = vmul.f32 %v1076, %v1076
      %v1078 = vsel %vm440, %v1077, 0.0
      %1079 = vadd.xlane.f32.xlu0 %v1078
      %v1080 = vpop.xlane.xlu0 %1079
      %v1081 = vmul.f32 %v1080, %v444
      %v1082 = vadd.f32 %v1081, 1e-05
      %v1083 = vrsqrt.pop %v1082
      %v1084 = vmul.f32 %v1076, %v1083
      %v1086 = vlaneseq
      %v1087 = vshrl.u32 %v1086, 7
      %v1088 = vsub.s32 0, %v1087
      %v1089 = vrot.slane %v1070, %v1088
      %v1091 = vmul.f32 %v1084, %v1089
      %v1093 = vlaneseq
      %v1094 = vshrl.u32 %v1093, 7
      %v1095 = vsub.s32 0, %v1094
      %v1096 = vrot.slane %v1071, %v1095
      %v1098 = vadd.f32 %v1091, %v1096
      %v1099 = vpack.c.bf16 %v1098, %v1098
      %v1100 = vld [vmem:[%s9] sm:$0xf]
      %v1101 = vld [vmem:[%s9 + $0x4] sm:$0xf]
      %v1102 = vld [vmem:[%s9 + $0x8] sm:$0xf]
      %v1103 = vld [vmem:[%s9 + $0xc] sm:$0xf]
      %v1104 = vld [vmem:[%s10] sm:$0x1]
      %v1106 = vlaneseq
      %v1107 = vshrl.u32 %v1106, 7
      %v1108 = vsub.s32 0, %v1107
      %v1109 = vrot.slane %v1104, %v1108
      %v1115 = vunpack.c.l.b16 %v1100
      %v1116 = vunpack.c.l.b16 %v1101
      %v1117 = vunpack.c.l.b16 %v1102
      %v1118 = vunpack.c.l.b16 %v1103
      %v1119 = vpack.c.b16 %v1116, %v1115
      %v1120 = vpack.c.b16 %v1118, %v1117
      %v1124 = vsel %vm493, %v1099, 0
      %1126 = vmatprep.subr.bf16.mxu0 0
      %1127 = vmatpush1.bf16.msra.mxu0 %v1119
      %1128 = vmatprep.subr.bf16.mxu0 0
      %1129 = vmatpush1.bf16.msra.mxu0 %v1120
      %1130 = vmatprep.subr.bf16.mxu0 0
      %1131 = vmatpush1.bf16.msra.mxu0 0
      %1132 = vmatprep.subr.bf16.mxu0 0
      %1133 = vmatpush1.bf16.msra.mxu0 0
      %1134 = vmatprep.subr.bf16.mxu0 0
      %1135 = vmatpush1.bf16.msra.mxu0 0
      %1136 = vmatprep.subr.bf16.mxu0 0
      %1137 = vmatpush1.bf16.msra.mxu0 0
      %1138 = vmatprep.subr.bf16.mxu0 0
      %1139 = vmatpush1.bf16.msra.mxu0 0
      %1140 = vmatprep.subr.bf16.mxu0 0
      %1141 = vmatpush1.bf16.msra.mxu0 0
      %1142 = vmatprep.subr.bf16.mxu0 0
      %1143 = vmatpush1.bf16.msra.mxu0 0
      %1144 = vmatprep.subr.bf16.mxu0 0
      %1145 = vmatpush1.bf16.msra.mxu0 0
      %1146 = vmatprep.subr.bf16.mxu0 0
      %1147 = vmatpush1.bf16.msra.mxu0 0
      %1148 = vmatprep.subr.bf16.mxu0 0
      %1149 = vmatpush1.bf16.msra.mxu0 0
      %1150 = vmatprep.subr.bf16.mxu0 0
      %1151 = vmatpush1.bf16.msra.mxu0 0
      %1152 = vmatprep.subr.bf16.mxu0 0
      %1153 = vmatpush1.bf16.msra.mxu0 0
      %1154 = vmatprep.subr.bf16.mxu0 0
      %1155 = vmatpush1.bf16.msra.mxu0 0
      %1156 = vmatprep.subr.bf16.mxu0 0
      %1157 = vmatpush1.bf16.msra.mxu0 0
      %1158 = vmatprep.mubr.bf16.mxu0 0
      %1159 = vmatmul.mubr.bf16.gmra.mrb[0].mxu0 %v1124
      %v1160 = vpop.f32.mrb[0].mxu0
      %v1161 = vadd.f32 %v1109, %v1160
      %v1162 = vpop.f32.mrb[0].mxu0
      %v1163 = vpop.f32.mrb[0].mxu0
      %v1164 = vpop.f32.mrb[0].mxu0
      %1165 = vdwg.mxu0
      %v1166 = vmul.f32 %v1161, 1.702
      %v1167 = vxor.u32 %v1166, 2147483648
      %v1168 = vmul.f32 %v1167, 1.442695
      %v1169 = vpow.pop %v1168
      %v1170 = vadd.f32 %v1169, 1.0
      %v1171 = vrcp.pop %v1170
      %v1172 = vmul.f32 1.0, %v1171
      %v1173 = vmul.f32 %v1161, %v1172
      %v1174 = vpack.c.bf16 %v1173, %v1173
      %v1175 = vld [vmem:[%s11] sm:$0xf]
      %v1176 = vld [vmem:[%s11 + $0x4] sm:$0xf]
      %v1177 = vld [vmem:[%s11 + $0x8] sm:$0xf]
      %v1178 = vld [vmem:[%s11 + $0xc] sm:$0xf]
      %v1179 = vld [vmem:[%s11 + $0x10] sm:$0xf]
      %v1180 = vld [vmem:[%s11 + $0x14] sm:$0xf]
      %v1181 = vld [vmem:[%s11 + $0x18] sm:$0xf]
      %v1182 = vld [vmem:[%s11 + $0x1c] sm:$0xf]
      %v1183 = vld [vmem:[%s11 + $0x20] sm:$0xf]
      %v1184 = vld [vmem:[%s11 + $0x24] sm:$0xf]
      %v1185 = vld [vmem:[%s11 + $0x28] sm:$0xf]
      %v1186 = vld [vmem:[%s11 + $0x2c] sm:$0xf]
      %v1187 = vld [vmem:[%s11 + $0x30] sm:$0xf]
      %v1188 = vld [vmem:[%s11 + $0x34] sm:$0xf]
      %v1189 = vld [vmem:[%s11 + $0x38] sm:$0xf]
      %v1190 = vld [vmem:[%s11 + $0x3c] sm:$0xf]
      %v1207 = vunpack.c.l.b16 %v1175
      %v1208 = vunpack.c.l.b16 %v1176
      %v1209 = vunpack.c.l.b16 %v1177
      %v1210 = vunpack.c.l.b16 %v1178
      %v1211 = vunpack.c.l.b16 %v1179
      %v1212 = vunpack.c.l.b16 %v1180
      %v1213 = vunpack.c.l.b16 %v1181
      %v1214 = vunpack.c.l.b16 %v1182
      %v1215 = vunpack.c.l.b16 %v1183
      %v1216 = vunpack.c.l.b16 %v1184
      %v1217 = vunpack.c.l.b16 %v1185
      %v1218 = vunpack.c.l.b16 %v1186
      %v1219 = vunpack.c.l.b16 %v1187
      %v1220 = vunpack.c.l.b16 %v1188
      %v1221 = vunpack.c.l.b16 %v1189
      %v1222 = vunpack.c.l.b16 %v1190
      %v1223 = vpack.c.b16 %v1208, %v1207
      %v1224 = vpack.c.b16 %v1210, %v1209
      %v1225 = vpack.c.b16 %v1212, %v1211
      %v1226 = vpack.c.b16 %v1214, %v1213
      %v1227 = vpack.c.b16 %v1216, %v1215
      %v1228 = vpack.c.b16 %v1218, %v1217
      %v1229 = vpack.c.b16 %v1220, %v1219
      %v1230 = vpack.c.b16 %v1222, %v1221
      %1239 = vmatprep.subr.bf16.mxu0 0
      %1240 = vmatpush1.bf16.msra.mxu0 %v1223
      %1241 = vmatprep.subr.bf16.mxu0 0
      %1242 = vmatpush1.bf16.msra.mxu0 %v1224
      %1243 = vmatprep.subr.bf16.mxu0 0
      %1244 = vmatpush1.bf16.msra.mxu0 %v1225
      %1245 = vmatprep.subr.bf16.mxu0 0
      %1246 = vmatpush1.bf16.msra.mxu0 %v1226
      %1247 = vmatprep.subr.bf16.mxu0 0
      %1248 = vmatpush1.bf16.msra.mxu0 %v1227
      %1249 = vmatprep.subr.bf16.mxu0 0
      %1250 = vmatpush1.bf16.msra.mxu0 %v1228
      %1251 = vmatprep.subr.bf16.mxu0 0
      %1252 = vmatpush1.bf16.msra.mxu0 %v1229
      %1253 = vmatprep.subr.bf16.mxu0 0
      %1254 = vmatpush1.bf16.msra.mxu0 %v1230
      %1255 = vmatprep.subr.bf16.mxu0 0
      %1256 = vmatpush1.bf16.msra.mxu0 0
      %1257 = vmatprep.subr.bf16.mxu0 0
      %1258 = vmatpush1.bf16.msra.mxu0 0
      %1259 = vmatprep.subr.bf16.mxu0 0
      %1260 = vmatpush1.bf16.msra.mxu0 0
      %1261 = vmatprep.subr.bf16.mxu0 0
      %1262 = vmatpush1.bf16.msra.mxu0 0
      %1263 = vmatprep.subr.bf16.mxu0 0
      %1264 = vmatpush1.bf16.msra.mxu0 0
      %1265 = vmatprep.subr.bf16.mxu0 0
      %1266 = vmatpush1.bf16.msra.mxu0 0
      %1267 = vmatprep.subr.bf16.mxu0 0
      %1268 = vmatpush1.bf16.msra.mxu0 0
      %1269 = vmatprep.subr.bf16.mxu0 0
      %1270 = vmatpush1.bf16.msra.mxu0 0
      %1271 = vmatprep.mubr.bf16.mxu0 0
      %1272 = vmatmul.mubr.bf16.gmra.mrb[0].mxu0 %v1174
      %v1273 = vpop.f32.mrb[0].mxu0
      %v1274 = vadd.f32 0.0, %v1273
      %v1275 = vpop.f32.mrb[0].mxu0
      %v1276 = vpop.f32.mrb[0].mxu0
      %v1277 = vpop.f32.mrb[0].mxu0
      %1278 = vdwg.mxu0
      %v1279 = vadd.f32 %v1069, %v1274
      %v1280 = vld [vmem:[%s12] sm:$0x1]
      %v1282 = vlaneseq
      %v1283 = vshrl.u32 %v1282, 7
      %v1284 = vsub.s32 0, %v1283
      %v1285 = vrot.slane %v1280, %v1284
      %v1287 = vadd.f32 %v1279, %v1285
      %1288 = vst.msk [vmem:[%s435] sm:$0x1f] %vm440, %v1287
      %p1289 = scmp.lt.s32.totalorder %s24, 1
      %s1290 = scalar_select %p1289, %s24, 1
      %s1291 = smul.addr %s1290, 8
      %s1292 = scalar_lea.vmem %s13, %s1291
      // Predicated region
      $region73: #{_lambda_.5} parent=71 // pred_check
        %p1293 = pneg %p320
      $region74: #{_lambda_.5} parent=71 // pred_check_branch
        %1295 = sbr.rel (%p1293) target = $region76
      $region75: #{_lambda_.5} parent=71 // pred_region
        _
      $region76: #{_lambda_.5} parent=71 // pred_fallthru
        _
    $region72: #{_lambda_.5} parent=5 // pred_fallthru
      _
    %p1296 = scmp.le.s32.totalorder 2, %s19
    // Predicated region
    $region77: #{_lambda_.5} parent=5 // pred_check
      %p1297 = pneg %p1296
    $region78: #{_lambda_.5} parent=5 // pred_check_branch
      %1299 = sbr.rel (%p1297) target = $region80
    $region79: #{_lambda_.5} parent=5 // pred_region
      %s1300 = ssub.s32 %s19, 2
      // Predicated region
      $region81: #{_lambda_.5} parent=79 // pred_check
        %p1301 = pneg %p326
      $region82: #{_lambda_.5} parent=79 // pred_check_branch
        %1303 = sbr.rel (%p1301) target = $region84
      $region83: #{_lambda_.5} parent=79 // pred_region
        %p1304 = scmp.lt.s32.totalorder %s25, 1
        %s1305 = scalar_select %p1304, %s25, 1
        %s1306 = smul.addr %s1305, 8
        %s1307 = scalar_lea.vmem %s13, %s1306
      $region84: #{_lambda_.5} parent=79 // pred_fallthru
        _
    $region80: #{_lambda_.5} parent=5 // pred_fallthru
      _
  $region6: #{_lambda_.5} parent=0 // loop_footer
    %s23 = sadd.s32 1, %s19
  $region7: #{_lambda_.5} parent=0 // loop_footer_branch
    %18 = sbr.rel target = $region3
  $region8: #{_lambda_.5} parent=0 // loop_exit
    _

</llo_original>
